<compile_context>
chip_gen: v7x
topology: tpu7x:2x2x1
jax: 0.10.0
libtpu: 0.0.40
codegen_flags: <defaults>
</compile_context>

<pallas_src>
import functools

import jax
import jax.numpy as jnp
from jax.experimental import pallas as pl
from jax.experimental.pallas import tpu as pltpu

N_IN = 38
N_OUT = 8
LAYER_SIZES = [N_IN, 320, 160, 80, 80, 40, 40, 20, 20, N_OUT]  # fc1..fc9

PAD_IN = 40    # 38 -> 40 (sublane multiple) for a clean first MXU pass
PAD_OUT = 128  # lane-dense output block; sliced back to 8 outside the kernel
PADDED_SIZES = (
    [PAD_IN]
    + [((d + 127) // 128) * 128 for d in LAYER_SIZES[1:-1]]
    + [PAD_OUT]
)


def _round_up(x, m):
    return ((x + m - 1) // m) * m


def mlp_kernel(x_ref, *refs):
    # refs = (w1..w9, b1..b9, o_ref); weights stored (in_features, out_features), bf16.
    w_refs = refs[0:9]
    b_refs = refs[9:18]
    o_ref = refs[18]

    h = x_ref[...]  # bf16 (TB, PAD_IN)
    # fc1..fc8: bf16 x bf16 MXU matmul with f32 accumulation, bias/ReLU in f32.
    for li in range(8):
        h = jnp.dot(h, w_refs[li][...], preferred_element_type=jnp.float32) + b_refs[li][...]
        h = jnp.maximum(h, 0.0).astype(jnp.bfloat16)
    # fc9 + Tanh, written as a lane-dense (TB, 128) f32 block (padded cols are exactly 0).
    h = jnp.dot(h, w_refs[8][...], preferred_element_type=jnp.float32) + b_refs[8][...]
    o_ref[...] = jnp.tanh(h)


def prepare_params(weights, biases):
    """Zero-pad weights/biases to MXU-friendly shapes and cast weights to bf16, ONCE."""
    w_p, b_p = [], []
    for i in range(9):
        din, dout = LAYER_SIZES[i], LAYER_SIZES[i + 1]
        pin, pout = PADDED_SIZES[i], PADDED_SIZES[i + 1]
        w = jnp.zeros((pin, pout), jnp.float32).at[:din, :dout].set(weights[i])
        w_p.append(w.astype(jnp.bfloat16))
        b_p.append(jnp.zeros((1, pout), jnp.float32).at[0, :dout].set(biases[i]))
    return w_p, b_p


@functools.partial(jax.jit, static_argnames=("block_b",))
def alpha_slow_forward(x, w_p, b_p, block_b=1024):
    """x: (B, 38) f32. w_p/b_p: padded params from prepare_params. Returns (B, 8) f32."""
    B = x.shape[0]
    B8 = _round_up(max(B, 1), 8)
    # Aim for >= 2 grid steps when B allows so the "parallel" batch axis shards across
    # both TensorCores on v7x; on single-TC v5e/v6e the extra step is ~0.35us (negligible).
    TB = max(8, min(block_b, _round_up(-(-B8 // 2), 8)))
    B_pad = _round_up(B, TB)

    # Pad batch to a tile multiple and width 38 -> 40; cast to bf16 for the MXU / smaller DMA.
    x_in = jnp.zeros((B_pad, PAD_IN), jnp.bfloat16).at[:B, :N_IN].set(x.astype(jnp.bfloat16))

    grid = (B_pad // TB,)

    # x: (TB, 40) bf16 tiles along the batch axis.
    in_specs = [pl.BlockSpec((TB, PAD_IN), lambda i: (i, 0))]
    # Weights: full-array blocks, grid-invariant (stay resident in VMEM, ~0.5 MiB bf16 total).
    for li in range(9):
        pin, pout = PADDED_SIZES[li], PADDED_SIZES[li + 1]
        in_specs.append(pl.BlockSpec((pin, pout), lambda i: (0, 0)))
    # Biases: (1, pout) f32 full-array blocks, grid-invariant.
    for li in range(9):
        pout = PADDED_SIZES[li + 1]
        in_specs.append(pl.BlockSpec((1, pout), lambda i: (0, 0)))

    out_spec = pl.BlockSpec((TB, PAD_OUT), lambda i: (i, 0))

    flops = 2 * B_pad * sum(PADDED_SIZES[i] * PADDED_SIZES[i + 1] for i in range(9))
    weight_bytes = 2 * sum(PADDED_SIZES[i] * PADDED_SIZES[i + 1] for i in range(9)) + 4 * sum(
        PADDED_SIZES[i + 1] for i in range(9)
    )
    cost = pl.CostEstimate(
        flops=flops,
        transcendentals=B_pad * PAD_OUT,
        bytes_accessed=2 * B_pad * PAD_IN + 4 * B_pad * PAD_OUT + weight_bytes,
    )

    out = pl.pallas_call(
        mlp_kernel,
        out_shape=jax.ShapeDtypeStruct((B_pad, PAD_OUT), jnp.float32),
        grid=grid,
        in_specs=in_specs,
        out_specs=out_spec,
        compiler_params=pltpu.CompilerParams(
            dimension_semantics=("parallel",),
            # 48 MiB: plenty for fat tiles on v5e/v6e, still ~16 MiB headroom on v7x (64 MiB).
            vmem_limit_bytes=48 * 1024 * 1024,
        ),
        cost_estimate=cost,
    )(x_in, *w_p, *b_p)

    return out[:B, :N_OUT]


def init_params(key):
    """Deterministic init mimicking PyTorch nn.Linear default: U(-1/sqrt(fan_in), +1/sqrt(fan_in))."""
    weights, biases = [], []
    for i in range(9):
        din, dout = LAYER_SIZES[i], LAYER_SIZES[i + 1]
        key, kw, kb = jax.random.split(key, 3)
        bound = 1.0 / jnp.sqrt(jnp.float32(din))
        weights.append(jax.random.uniform(kw, (din, dout), jnp.float32, -bound, bound))
        biases.append(jax.random.uniform(kb, (dout,), jnp.float32, -bound, bound))
    return weights, biases


def reference_forward(x, weights, biases):
    """Pure-JAX f32 reference matching the PyTorch module."""
    h = x
    for i in range(8):
        h = jnp.maximum(h @ weights[i] + biases[i], 0.0)
    return jnp.tanh(h @ weights[8] + biases[8])


if __name__ == "__main__":
    key = jax.random.PRNGKey(0)
    key, kx1, kx2 = jax.random.split(key, 3)

    weights, biases = init_params(key)
    w_p, b_p = prepare_params(weights, biases)  # padded + bf16-cast once, reused every call

    # Tolerances are loosened vs the f32 reference because matmul inputs are bf16.
    ATOL = 2e-2
    RTOL = 2e-2

    # Test 1: small batch -> TB=8, 2 grid steps (exercises the >=2-step / megacore path).
    B1 = 16
    x1 = jax.random.normal(kx1, (B1, N_IN), jnp.float32)
    out1 = jax.block_until_ready(alpha_slow_forward(x1, w_p, b_p))
    ref1 = reference_forward(x1, weights, biases)
    assert out1.shape == (B1, N_OUT), out1.shape
    assert jnp.allclose(out1, ref1, atol=ATOL, rtol=RTOL), float(jnp.max(jnp.abs(out1 - ref1)))

    # Test 2: non-multiple batch with a smaller tile -> multi-step grid + batch padding path.
    B2 = 300
    x2 = jax.random.normal(kx2, (B2, N_IN), jnp.float32)
    out2 = jax.block_until_ready(alpha_slow_forward(x2, w_p, b_p, block_b=128))
    ref2 = reference_forward(x2, weights, biases)
    assert out2.shape == (B2, N_OUT), out2.shape
    assert jnp.allclose(out2, ref2, atol=ATOL, rtol=RTOL), float(jnp.max(jnp.abs(out2 - ref2)))

    print("KERNEL_OK")
</pallas_src>

<mosaic_0001>
module attributes {stable_mosaic.version = 11 : i64} {
  func.func @mlp_kernel(%arg0: i32, %arg1: memref<8x40xbf16, #tpu.memory_space<vmem>>, %arg2: memref<40x384xbf16, #tpu.memory_space<vmem>>, %arg3: memref<384x256xbf16, #tpu.memory_space<vmem>>, %arg4: memref<256x128xbf16, #tpu.memory_space<vmem>>, %arg5: memref<128x128xbf16, #tpu.memory_space<vmem>>, %arg6: memref<128x128xbf16, #tpu.memory_space<vmem>>, %arg7: memref<128x128xbf16, #tpu.memory_space<vmem>>, %arg8: memref<128x128xbf16, #tpu.memory_space<vmem>>, %arg9: memref<128x128xbf16, #tpu.memory_space<vmem>>, %arg10: memref<128x128xbf16, #tpu.memory_space<vmem>>, %arg11: memref<1x384xf32, #tpu.memory_space<vmem>>, %arg12: memref<1x256xf32, #tpu.memory_space<vmem>>, %arg13: memref<1x128xf32, #tpu.memory_space<vmem>>, %arg14: memref<1x128xf32, #tpu.memory_space<vmem>>, %arg15: memref<1x128xf32, #tpu.memory_space<vmem>>, %arg16: memref<1x128xf32, #tpu.memory_space<vmem>>, %arg17: memref<1x128xf32, #tpu.memory_space<vmem>>, %arg18: memref<1x128xf32, #tpu.memory_space<vmem>>, %arg19: memref<1x128xf32, #tpu.memory_space<vmem>>, %arg20: memref<8x128xf32, #tpu.memory_space<vmem>>) attributes {dimension_semantics = [#tpu.dimension_semantics<parallel>], iteration_bounds = array<i64: 2>, scalar_prefetch = 0 : i64, scratch_operands = 0 : i64, tpu.core_type = #tpu.core_type<tc>, window_params = [{transform_indices = @transform_0, window_bounds = array<i64: 8, 40>}, {pipeline_mode = #tpu.pipeline_mode<synchronous>, transform_indices = @transform_1, window_bounds = array<i64: 40, 384>}, {pipeline_mode = #tpu.pipeline_mode<synchronous>, transform_indices = @transform_2, window_bounds = array<i64: 384, 256>}, {pipeline_mode = #tpu.pipeline_mode<synchronous>, transform_indices = @transform_3, window_bounds = array<i64: 256, 128>}, {pipeline_mode = #tpu.pipeline_mode<synchronous>, transform_indices = @transform_4, window_bounds = array<i64: 128, 128>}, {pipeline_mode = #tpu.pipeline_mode<synchronous>, transform_indices = @transform_5, window_bounds = array<i64: 128, 128>}, {pipeline_mode = #tpu.pipeline_mode<synchronous>, transform_indices = @transform_6, window_bounds = array<i64: 128, 128>}, {pipeline_mode = #tpu.pipeline_mode<synchronous>, transform_indices = @transform_7, window_bounds = array<i64: 128, 128>}, {pipeline_mode = #tpu.pipeline_mode<synchronous>, transform_indices = @transform_8, window_bounds = array<i64: 128, 128>}, {pipeline_mode = #tpu.pipeline_mode<synchronous>, transform_indices = @transform_9, window_bounds = array<i64: 128, 128>}, {pipeline_mode = #tpu.pipeline_mode<synchronous>, transform_indices = @transform_10, window_bounds = array<i64: 1, 384>}, {pipeline_mode = #tpu.pipeline_mode<synchronous>, transform_indices = @transform_11, window_bounds = array<i64: 1, 256>}, {pipeline_mode = #tpu.pipeline_mode<synchronous>, transform_indices = @transform_12, window_bounds = array<i64: 1, 128>}, {pipeline_mode = #tpu.pipeline_mode<synchronous>, transform_indices = @transform_13, window_bounds = array<i64: 1, 128>}, {pipeline_mode = #tpu.pipeline_mode<synchronous>, transform_indices = @transform_14, window_bounds = array<i64: 1, 128>}, {pipeline_mode = #tpu.pipeline_mode<synchronous>, transform_indices = @transform_15, window_bounds = array<i64: 1, 128>}, {pipeline_mode = #tpu.pipeline_mode<synchronous>, transform_indices = @transform_16, window_bounds = array<i64: 1, 128>}, {pipeline_mode = #tpu.pipeline_mode<synchronous>, transform_indices = @transform_17, window_bounds = array<i64: 1, 128>}, {pipeline_mode = #tpu.pipeline_mode<synchronous>, transform_indices = @transform_18, window_bounds = array<i64: 1, 128>}, {transform_indices = @transform_19, window_bounds = array<i64: 8, 128>}]} {
    %c0 = arith.constant 0 : index
    %c0_0 = arith.constant 0 : index
    %0 = vector.load %arg1[%c0, %c0_0] : memref<8x40xbf16, #tpu.memory_space<vmem>>, vector<8x40xbf16>
    %c0_1 = arith.constant 0 : index
    %c0_2 = arith.constant 0 : index
    %1 = vector.load %arg2[%c0_1, %c0_2] : memref<40x384xbf16, #tpu.memory_space<vmem>>, vector<40x384xbf16>
    %cst = arith.constant dense<0.000000e+00> : vector<8x384xf32>
    %2 = tpu.matmul %0, %1, %cst {dimension_numbers = #tpu.dot_dimension_numbers<[1], [0], [0], [1], [0, 0, 1, 1], [], []>} : vector<8x40xbf16>, vector<40x384xbf16>, vector<8x384xf32> -> vector<8x384xf32>
    %c0_3 = arith.constant 0 : index
    %c0_4 = arith.constant 0 : index
    %3 = vector.load %arg11[%c0_3, %c0_4] : memref<1x384xf32, #tpu.memory_space<vmem>>, vector<1x384xf32>
    %4 = vector.broadcast %3 : vector<1x384xf32> to vector<8x384xf32>
    %5 = arith.addf %2, %4 : vector<8x384xf32>
    %cst_5 = arith.constant 0.000000e+00 : f32
    %6 = vector.broadcast %cst_5 : f32 to vector<8x384xf32>
    %7 = arith.maximumf %5, %6 : vector<8x384xf32>
    %8 = arith.truncf %7 : vector<8x384xf32> to vector<8x384xbf16>
    %c0_6 = arith.constant 0 : index
    %c0_7 = arith.constant 0 : index
    %9 = vector.load %arg3[%c0_6, %c0_7] : memref<384x256xbf16, #tpu.memory_space<vmem>>, vector<384x256xbf16>
    %cst_8 = arith.constant dense<0.000000e+00> : vector<8x256xf32>
    %10 = tpu.matmul %8, %9, %cst_8 {dimension_numbers = #tpu.dot_dimension_numbers<[1], [0], [0], [1], [0, 0, 1, 1], [], []>} : vector<8x384xbf16>, vector<384x256xbf16>, vector<8x256xf32> -> vector<8x256xf32>
    %c0_9 = arith.constant 0 : index
    %c0_10 = arith.constant 0 : index
    %11 = vector.load %arg12[%c0_9, %c0_10] : memref<1x256xf32, #tpu.memory_space<vmem>>, vector<1x256xf32>
    %12 = vector.broadcast %11 : vector<1x256xf32> to vector<8x256xf32>
    %13 = arith.addf %10, %12 : vector<8x256xf32>
    %cst_11 = arith.constant 0.000000e+00 : f32
    %14 = vector.broadcast %cst_11 : f32 to vector<8x256xf32>
    %15 = arith.maximumf %13, %14 : vector<8x256xf32>
    %16 = arith.truncf %15 : vector<8x256xf32> to vector<8x256xbf16>
    %c0_12 = arith.constant 0 : index
    %c0_13 = arith.constant 0 : index
    %17 = vector.load %arg4[%c0_12, %c0_13] : memref<256x128xbf16, #tpu.memory_space<vmem>>, vector<256x128xbf16>
    %cst_14 = arith.constant dense<0.000000e+00> : vector<8x128xf32>
    %18 = tpu.matmul %16, %17, %cst_14 {dimension_numbers = #tpu.dot_dimension_numbers<[1], [0], [0], [1], [0, 0, 1, 1], [], []>} : vector<8x256xbf16>, vector<256x128xbf16>, vector<8x128xf32> -> vector<8x128xf32>
    %c0_15 = arith.constant 0 : index
    %c0_16 = arith.constant 0 : index
    %19 = vector.load %arg13[%c0_15, %c0_16] : memref<1x128xf32, #tpu.memory_space<vmem>>, vector<1x128xf32>
    %20 = vector.broadcast %19 : vector<1x128xf32> to vector<8x128xf32>
    %21 = arith.addf %18, %20 : vector<8x128xf32>
    %cst_17 = arith.constant 0.000000e+00 : f32
    %22 = vector.broadcast %cst_17 : f32 to vector<8x128xf32>
    %23 = arith.maximumf %21, %22 : vector<8x128xf32>
    %24 = arith.truncf %23 : vector<8x128xf32> to vector<8x128xbf16>
    %c0_18 = arith.constant 0 : index
    %c0_19 = arith.constant 0 : index
    %25 = vector.load %arg5[%c0_18, %c0_19] : memref<128x128xbf16, #tpu.memory_space<vmem>>, vector<128x128xbf16>
    %cst_20 = arith.constant dense<0.000000e+00> : vector<8x128xf32>
    %26 = tpu.matmul %24, %25, %cst_20 {dimension_numbers = #tpu.dot_dimension_numbers<[1], [0], [0], [1], [0, 0, 1, 1], [], []>} : vector<8x128xbf16>, vector<128x128xbf16>, vector<8x128xf32> -> vector<8x128xf32>
    %c0_21 = arith.constant 0 : index
    %c0_22 = arith.constant 0 : index
    %27 = vector.load %arg14[%c0_21, %c0_22] : memref<1x128xf32, #tpu.memory_space<vmem>>, vector<1x128xf32>
    %28 = vector.broadcast %27 : vector<1x128xf32> to vector<8x128xf32>
    %29 = arith.addf %26, %28 : vector<8x128xf32>
    %cst_23 = arith.constant 0.000000e+00 : f32
    %30 = vector.broadcast %cst_23 : f32 to vector<8x128xf32>
    %31 = arith.maximumf %29, %30 : vector<8x128xf32>
    %32 = arith.truncf %31 : vector<8x128xf32> to vector<8x128xbf16>
    %c0_24 = arith.constant 0 : index
    %c0_25 = arith.constant 0 : index
    %33 = vector.load %arg6[%c0_24, %c0_25] : memref<128x128xbf16, #tpu.memory_space<vmem>>, vector<128x128xbf16>
    %cst_26 = arith.constant dense<0.000000e+00> : vector<8x128xf32>
    %34 = tpu.matmul %32, %33, %cst_26 {dimension_numbers = #tpu.dot_dimension_numbers<[1], [0], [0], [1], [0, 0, 1, 1], [], []>} : vector<8x128xbf16>, vector<128x128xbf16>, vector<8x128xf32> -> vector<8x128xf32>
    %c0_27 = arith.constant 0 : index
    %c0_28 = arith.constant 0 : index
    %35 = vector.load %arg15[%c0_27, %c0_28] : memref<1x128xf32, #tpu.memory_space<vmem>>, vector<1x128xf32>
    %36 = vector.broadcast %35 : vector<1x128xf32> to vector<8x128xf32>
    %37 = arith.addf %34, %36 : vector<8x128xf32>
    %cst_29 = arith.constant 0.000000e+00 : f32
    %38 = vector.broadcast %cst_29 : f32 to vector<8x128xf32>
    %39 = arith.maximumf %37, %38 : vector<8x128xf32>
    %40 = arith.truncf %39 : vector<8x128xf32> to vector<8x128xbf16>
    %c0_30 = arith.constant 0 : index
    %c0_31 = arith.constant 0 : index
    %41 = vector.load %arg7[%c0_30, %c0_31] : memref<128x128xbf16, #tpu.memory_space<vmem>>, vector<128x128xbf16>
    %cst_32 = arith.constant dense<0.000000e+00> : vector<8x128xf32>
    %42 = tpu.matmul %40, %41, %cst_32 {dimension_numbers = #tpu.dot_dimension_numbers<[1], [0], [0], [1], [0, 0, 1, 1], [], []>} : vector<8x128xbf16>, vector<128x128xbf16>, vector<8x128xf32> -> vector<8x128xf32>
    %c0_33 = arith.constant 0 : index
    %c0_34 = arith.constant 0 : index
    %43 = vector.load %arg16[%c0_33, %c0_34] : memref<1x128xf32, #tpu.memory_space<vmem>>, vector<1x128xf32>
    %44 = vector.broadcast %43 : vector<1x128xf32> to vector<8x128xf32>
    %45 = arith.addf %42, %44 : vector<8x128xf32>
    %cst_35 = arith.constant 0.000000e+00 : f32
    %46 = vector.broadcast %cst_35 : f32 to vector<8x128xf32>
    %47 = arith.maximumf %45, %46 : vector<8x128xf32>
    %48 = arith.truncf %47 : vector<8x128xf32> to vector<8x128xbf16>
    %c0_36 = arith.constant 0 : index
    %c0_37 = arith.constant 0 : index
    %49 = vector.load %arg8[%c0_36, %c0_37] : memref<128x128xbf16, #tpu.memory_space<vmem>>, vector<128x128xbf16>
    %cst_38 = arith.constant dense<0.000000e+00> : vector<8x128xf32>
    %50 = tpu.matmul %48, %49, %cst_38 {dimension_numbers = #tpu.dot_dimension_numbers<[1], [0], [0], [1], [0, 0, 1, 1], [], []>} : vector<8x128xbf16>, vector<128x128xbf16>, vector<8x128xf32> -> vector<8x128xf32>
    %c0_39 = arith.constant 0 : index
    %c0_40 = arith.constant 0 : index
    %51 = vector.load %arg17[%c0_39, %c0_40] : memref<1x128xf32, #tpu.memory_space<vmem>>, vector<1x128xf32>
    %52 = vector.broadcast %51 : vector<1x128xf32> to vector<8x128xf32>
    %53 = arith.addf %50, %52 : vector<8x128xf32>
    %cst_41 = arith.constant 0.000000e+00 : f32
    %54 = vector.broadcast %cst_41 : f32 to vector<8x128xf32>
    %55 = arith.maximumf %53, %54 : vector<8x128xf32>
    %56 = arith.truncf %55 : vector<8x128xf32> to vector<8x128xbf16>
    %c0_42 = arith.constant 0 : index
    %c0_43 = arith.constant 0 : index
    %57 = vector.load %arg9[%c0_42, %c0_43] : memref<128x128xbf16, #tpu.memory_space<vmem>>, vector<128x128xbf16>
    %cst_44 = arith.constant dense<0.000000e+00> : vector<8x128xf32>
    %58 = tpu.matmul %56, %57, %cst_44 {dimension_numbers = #tpu.dot_dimension_numbers<[1], [0], [0], [1], [0, 0, 1, 1], [], []>} : vector<8x128xbf16>, vector<128x128xbf16>, vector<8x128xf32> -> vector<8x128xf32>
    %c0_45 = arith.constant 0 : index
    %c0_46 = arith.constant 0 : index
    %59 = vector.load %arg18[%c0_45, %c0_46] : memref<1x128xf32, #tpu.memory_space<vmem>>, vector<1x128xf32>
    %60 = vector.broadcast %59 : vector<1x128xf32> to vector<8x128xf32>
    %61 = arith.addf %58, %60 : vector<8x128xf32>
    %cst_47 = arith.constant 0.000000e+00 : f32
    %62 = vector.broadcast %cst_47 : f32 to vector<8x128xf32>
    %63 = arith.maximumf %61, %62 : vector<8x128xf32>
    %64 = arith.truncf %63 : vector<8x128xf32> to vector<8x128xbf16>
    %c0_48 = arith.constant 0 : index
    %c0_49 = arith.constant 0 : index
    %65 = vector.load %arg10[%c0_48, %c0_49] : memref<128x128xbf16, #tpu.memory_space<vmem>>, vector<128x128xbf16>
    %cst_50 = arith.constant dense<0.000000e+00> : vector<8x128xf32>
    %66 = tpu.matmul %64, %65, %cst_50 {dimension_numbers = #tpu.dot_dimension_numbers<[1], [0], [0], [1], [0, 0, 1, 1], [], []>} : vector<8x128xbf16>, vector<128x128xbf16>, vector<8x128xf32> -> vector<8x128xf32>
    %c0_51 = arith.constant 0 : index
    %c0_52 = arith.constant 0 : index
    %67 = vector.load %arg19[%c0_51, %c0_52] : memref<1x128xf32, #tpu.memory_space<vmem>>, vector<1x128xf32>
    %68 = vector.broadcast %67 : vector<1x128xf32> to vector<8x128xf32>
    %69 = arith.addf %66, %68 : vector<8x128xf32>
    %70 = math.tanh %69 : vector<8x128xf32>
    %c0_53 = arith.constant 0 : index
    %c0_54 = arith.constant 0 : index
    %71 = vector.load %arg20[%c0_53, %c0_54] : memref<8x128xf32, #tpu.memory_space<vmem>>, vector<8x128xf32>
    tpu.vector_store %arg20[%c0_53, %c0_54], %70 {strides = array<i32>} : memref<8x128xf32, #tpu.memory_space<vmem>>, vector<8x128xf32>,
    return
  }
  func.func @transform_0(%arg0: i32) -> (i32, i32) {
    %c0_i32 = arith.constant 0 : i32
    %c0_i32_0 = arith.constant 0 : i32
    return %arg0, %c0_i32 : i32, i32
  }
  func.func @transform_1(%arg0: i32) -> (i32, i32) {
    %c0_i32 = arith.constant 0 : i32
    %c0_i32_0 = arith.constant 0 : i32
    %c0_i32_1 = arith.constant 0 : i32
    return %c0_i32, %c0_i32_0 : i32, i32
  }
  func.func @transform_2(%arg0: i32) -> (i32, i32) {
    %c0_i32 = arith.constant 0 : i32
    %c0_i32_0 = arith.constant 0 : i32
    %c0_i32_1 = arith.constant 0 : i32
    return %c0_i32, %c0_i32_0 : i32, i32
  }
  func.func @transform_3(%arg0: i32) -> (i32, i32) {
    %c0_i32 = arith.constant 0 : i32
    %c0_i32_0 = arith.constant 0 : i32
    %c0_i32_1 = arith.constant 0 : i32
    return %c0_i32, %c0_i32_0 : i32, i32
  }
  func.func @transform_4(%arg0: i32) -> (i32, i32) {
    %c0_i32 = arith.constant 0 : i32
    %c0_i32_0 = arith.constant 0 : i32
    %c0_i32_1 = arith.constant 0 : i32
    return %c0_i32, %c0_i32_0 : i32, i32
  }
  func.func @transform_5(%arg0: i32) -> (i32, i32) {
    %c0_i32 = arith.constant 0 : i32
    %c0_i32_0 = arith.constant 0 : i32
    %c0_i32_1 = arith.constant 0 : i32
    return %c0_i32, %c0_i32_0 : i32, i32
  }
  func.func @transform_6(%arg0: i32) -> (i32, i32) {
    %c0_i32 = arith.constant 0 : i32
    %c0_i32_0 = arith.constant 0 : i32
    %c0_i32_1 = arith.constant 0 : i32
    return %c0_i32, %c0_i32_0 : i32, i32
  }
  func.func @transform_7(%arg0: i32) -> (i32, i32) {
    %c0_i32 = arith.constant 0 : i32
    %c0_i32_0 = arith.constant 0 : i32
    %c0_i32_1 = arith.constant 0 : i32
    return %c0_i32, %c0_i32_0 : i32, i32
  }
  func.func @transform_8(%arg0: i32) -> (i32, i32) {
    %c0_i32 = arith.constant 0 : i32
    %c0_i32_0 = arith.constant 0 : i32
    %c0_i32_1 = arith.constant 0 : i32
    return %c0_i32, %c0_i32_0 : i32, i32
  }
  func.func @transform_9(%arg0: i32) -> (i32, i32) {
    %c0_i32 = arith.constant 0 : i32
    %c0_i32_0 = arith.constant 0 : i32
    %c0_i32_1 = arith.constant 0 : i32
    return %c0_i32, %c0_i32_0 : i32, i32
  }
  func.func @transform_10(%arg0: i32) -> (i32, i32) {
    %c0_i32 = arith.constant 0 : i32
    %c0_i32_0 = arith.constant 0 : i32
    %c0_i32_1 = arith.constant 0 : i32
    return %c0_i32, %c0_i32_0 : i32, i32
  }
  func.func @transform_11(%arg0: i32) -> (i32, i32) {
    %c0_i32 = arith.constant 0 : i32
    %c0_i32_0 = arith.constant 0 : i32
    %c0_i32_1 = arith.constant 0 : i32
    return %c0_i32, %c0_i32_0 : i32, i32
  }
  func.func @transform_12(%arg0: i32) -> (i32, i32) {
    %c0_i32 = arith.constant 0 : i32
    %c0_i32_0 = arith.constant 0 : i32
    %c0_i32_1 = arith.constant 0 : i32
    return %c0_i32, %c0_i32_0 : i32, i32
  }
  func.func @transform_13(%arg0: i32) -> (i32, i32) {
    %c0_i32 = arith.constant 0 : i32
    %c0_i32_0 = arith.constant 0 : i32
    %c0_i32_1 = arith.constant 0 : i32
    return %c0_i32, %c0_i32_0 : i32, i32
  }
  func.func @transform_14(%arg0: i32) -> (i32, i32) {
    %c0_i32 = arith.constant 0 : i32
    %c0_i32_0 = arith.constant 0 : i32
    %c0_i32_1 = arith.constant 0 : i32
    return %c0_i32, %c0_i32_0 : i32, i32
  }
  func.func @transform_15(%arg0: i32) -> (i32, i32) {
    %c0_i32 = arith.constant 0 : i32
    %c0_i32_0 = arith.constant 0 : i32
    %c0_i32_1 = arith.constant 0 : i32
    return %c0_i32, %c0_i32_0 : i32, i32
  }
  func.func @transform_16(%arg0: i32) -> (i32, i32) {
    %c0_i32 = arith.constant 0 : i32
    %c0_i32_0 = arith.constant 0 : i32
    %c0_i32_1 = arith.constant 0 : i32
    return %c0_i32, %c0_i32_0 : i32, i32
  }
  func.func @transform_17(%arg0: i32) -> (i32, i32) {
    %c0_i32 = arith.constant 0 : i32
    %c0_i32_0 = arith.constant 0 : i32
    %c0_i32_1 = arith.constant 0 : i32
    return %c0_i32, %c0_i32_0 : i32, i32
  }
  func.func @transform_18(%arg0: i32) -> (i32, i32) {
    %c0_i32 = arith.constant 0 : i32
    %c0_i32_0 = arith.constant 0 : i32
    %c0_i32_1 = arith.constant 0 : i32
    return %c0_i32, %c0_i32_0 : i32, i32
  }
  func.func @transform_19(%arg0: i32) -> (i32, i32) {
    %c0_i32 = arith.constant 0 : i32
    %c0_i32_0 = arith.constant 0 : i32
    return %arg0, %c0_i32 : i32, i32
  }
}

</mosaic_0001>

<llo_original>
// kernel: alpha_slow_forward.1
$region0: #{alpha_slow_forward.1}
  #allocation0 [shape = 'u32[]', space=smem, size = 0x4, offset = 0x4, fixed_abs, tag = 'smem constant byte address 0x4 - core index']
  #allocation1 [shape = 'u32[144,128]{1,0:T(1,128)}', space=vmem, size = 0x12000, scoped, tag = 'internal scratch']
  %s0 = inlined_call_operand.vmem [shape: bf16[16,40], index: 0, kind: input, shape index: {}]
  %s1 = inlined_call_operand.hbm [shape: bf16[40,384], index: 1, kind: input, shape index: {}]
  %s2 = inlined_call_operand.hbm [shape: bf16[384,256], index: 2, kind: input, shape index: {}]
  %s3 = inlined_call_operand.hbm [shape: bf16[256,128], index: 3, kind: input, shape index: {}]
  %s4 = inlined_call_operand.hbm [shape: bf16[128,128], index: 4, kind: input, shape index: {}]
  %s5 = inlined_call_operand.vmem [shape: bf16[128,128], index: 5, kind: input, shape index: {}]
  %s6 = inlined_call_operand.hbm [shape: bf16[128,128], index: 6, kind: input, shape index: {}]
  %s7 = inlined_call_operand.hbm [shape: bf16[128,128], index: 7, kind: input, shape index: {}]
  %s8 = inlined_call_operand.hbm [shape: bf16[128,128], index: 8, kind: input, shape index: {}]
  %s9 = inlined_call_operand.hbm [shape: bf16[128,128], index: 9, kind: input, shape index: {}]
  %s10 = inlined_call_operand.vmem [shape: f32[1,384], index: 10, kind: input, shape index: {}]
  %s11 = inlined_call_operand.vmem [shape: f32[1,256], index: 11, kind: input, shape index: {}]
  %s12 = inlined_call_operand.vmem [shape: f32[1,128], index: 12, kind: input, shape index: {}]
  %s13 = inlined_call_operand.vmem [shape: f32[1,128], index: 13, kind: input, shape index: {}]
  %s14 = inlined_call_operand.vmem [shape: f32[1,128], index: 14, kind: input, shape index: {}]
  %s15 = inlined_call_operand.vmem [shape: f32[1,128], index: 15, kind: input, shape index: {}]
  %s16 = inlined_call_operand.vmem [shape: f32[1,128], index: 16, kind: input, shape index: {}]
  %s17 = inlined_call_operand.vmem [shape: f32[1,128], index: 17, kind: input, shape index: {}]
  %s18 = inlined_call_operand.vmem [shape: f32[1,128], index: 18, kind: input, shape index: {}]
  %s19 = inlined_call_operand.vmem [shape: f32[16,128], index: 19, kind: output, shape index: {}]
  %s20 = sld [smem:[#allocation0]]
  $region141: #{alpha_slow_forward.1} parent=0
    _
  %s22 = ssub.s32 1, %s20
  %s23 = scalar_select 0, %s22, %s20
  $region1: #{alpha_slow_forward.1} parent=0
    #allocation2 [shape = 'u8[30720]{0}', space=vmem, size = 0x7800, scoped, tag = 'input window, operand 1, single buffered']
    #allocation3 [shape = 's32[2]{0}', space=sflag, size = 0x8, scoped, tag = 'scoped memory for alpha_slow_forward.1']
    #allocation4 [shape = 'u8[196608]{0}', space=vmem, size = 0x30000, scoped, tag = 'input window, operand 2, single buffered']
    #allocation5 [shape = 's32[1]{0}', space=sflag, size = 0x4, scoped, tag = 'scoped memory for alpha_slow_forward.1']
    #allocation6 [shape = 'u8[65536]{0}', space=vmem, size = 0x10000, scoped, tag = 'input window, operand 3, single buffered']
    #allocation7 [shape = 'u8[32768]{0}', space=vmem, size = 0x8000, scoped, tag = 'input window, operand 4, single buffered']
    #allocation8 [shape = 's32[1]{0}', space=sflag, size = 0x4, scoped, tag = 'scoped memory for alpha_slow_forward.1']
    #allocation9 [shape = 'u8[32768]{0}', space=vmem, size = 0x8000, scoped, tag = 'input window, operand 6, single buffered']
    #allocation10 [shape = 'u8[32768]{0}', space=vmem, size = 0x8000, scoped, tag = 'input window, operand 7, single buffered']
    #allocation11 [shape = 's32[1]{0}', space=sflag, size = 0x4, scoped, tag = 'scoped memory for alpha_slow_forward.1']
    #allocation12 [shape = 'u8[32768]{0}', space=vmem, size = 0x8000, scoped, tag = 'input window, operand 8, single buffered']
    #allocation13 [shape = 'u8[32768]{0}', space=vmem, size = 0x8000, scoped, tag = 'input window, operand 9, single buffered']
    #allocation14 [shape = 's32[1]{0}', space=sflag, size = 0x4, scoped, tag = 'scoped memory for alpha_slow_forward.1']
    %24 = vsyncpa [#allocation3], 0
    %25 = vsyncpa [#allocation5], 0
    %26 = vsyncpa [#allocation8], 0
    %27 = vsyncpa [#allocation11], 0
    %28 = vsyncpa [#allocation14], 0
    loop: start=0, step=1, limit=4
    $region2: #{alpha_slow_forward.1} parent=1 // loop_pre_header
      _
    $region3: #{alpha_slow_forward.1} parent=1 // loop_header
      %s30 = sphi 0, %s34
      %p31 = scmp.ge.s32.totalorder %s30, 4
      %s40 = sphi 0, %s42
      %s43 = sphi 0, %s40
      %s44 = sphi 0, %s43
      %s60 = sphi 0, %s44
      %s64 = sphi 0, %s64
      %s66 = sphi 0, %s64
      %s67 = sphi 0, %s66
      %s81 = sphi 0, %s67
      %s85 = sphi 0, %s85
      %s87 = sphi 0, %s85
      %s88 = sphi 0, %s87
      %s102 = sphi 0, %s88
      %s106 = sphi 0, %s106
      %s108 = sphi 0, %s106
      %s109 = sphi 0, %s108
      %s123 = sphi 0, %s109
      %s127 = sphi 0, %s127
      %s129 = sphi 0, %s127
      %s130 = sphi 0, %s129
      %s144 = sphi 0, %s130
      %s148 = sphi 0, %s148
      %s150 = sphi 0, %s148
      %s151 = sphi 0, %s150
      %s165 = sphi 0, %s151
      %s169 = sphi 0, %s169
      %s171 = sphi 0, %s169
      %s172 = sphi 0, %s171
      %s186 = sphi 0, %s172
      %s190 = sphi 0, %s190
      %s192 = sphi 0, %s190
      %s193 = sphi 0, %s192
      %s207 = sphi 0, %s193
      %s211 = sphi 0, %s211
      %s213 = sphi 0, %s211
      %s214 = sphi 0, %s213
      %s228 = sphi 0, %s214
      %s232 = sphi 0, %s232
      %s234 = sphi 0, %s232
      %s235 = sphi 0, %s234
      %s249 = sphi 0, %s235
      %s253 = sphi 0, %s253
      %s255 = sphi 0, %s253
      %s256 = sphi 0, %s255
      %s270 = sphi 0, %s256
      %s274 = sphi 0, %s274
      %s276 = sphi 0, %s274
      %s277 = sphi 0, %s276
      %s291 = sphi 0, %s277
      %s295 = sphi 0, %s295
      %s297 = sphi 0, %s295
      %s298 = sphi 0, %s297
      %s312 = sphi 0, %s298
      %s316 = sphi 0, %s316
      %s318 = sphi 0, %s316
      %s319 = sphi 0, %s318
      %s333 = sphi 0, %s319
      %s337 = sphi 0, %s337
      %s339 = sphi 0, %s337
      %s340 = sphi 0, %s339
      %s354 = sphi 0, %s340
      %s358 = sphi 0, %s358
      %s360 = sphi 0, %s358
      %s361 = sphi 0, %s360
      %s375 = sphi 0, %s361
      %s379 = sphi 0, %s379
      %s381 = sphi 0, %s379
      %s382 = sphi 0, %s381
      %s396 = sphi 0, %s382
      %s400 = sphi 0, %s400
      %s402 = sphi 0, %s400
      %s403 = sphi 0, %s402
      %s417 = sphi 0, %s403
      %s421 = sphi 0, %s421
      %s423 = sphi 0, %s421
      %s424 = sphi 0, %s423
      %s438 = sphi 0, %s424
      %s444 = sphi 0, %s446
      %s447 = sphi 0, %s444
      %s448 = sphi 0, %s447
      %s464 = sphi 0, %s448
    $region4: #{alpha_slow_forward.1} parent=1 // loop_header_branch
      %33 = sbr.rel (%p31) target = $region8
    $region5: #{alpha_slow_forward.1} parent=1 // loop_body
      %s35 = ssub.s32 %s30, 1
      %s36 = ssub.s32 %s30, 2
      %s37 = sadd.s32 %s30, 1
      %s38 = ssub.s32 %s30, %s37
      %p39 = scmp.eq.s32.totalorder %s38, 0
      %s41 = sadd.s32 %s40, 1
      %s42 = scalar_select %p39, %s40, %s41
      %p45 = pneg %p39
      %p46 = scmp.eq.s32.totalorder %s30, 1
      %p47 = por %p45, %p46
      %p48 = scmp.ne.s32.totalorder %s40, %s43
      %p49 = scmp.eq.s32.totalorder %s30, 0
      %p50 = por %p48, %p49
      %p51 = scmp.ne.s32.totalorder %s40, %s43
      %p52 = scmp.eq.s32.totalorder %s35, 1
      %p53 = por %p51, %p52
      %p54 = scmp.ne.s32.totalorder %s43, %s44
      %p55 = scmp.eq.s32.totalorder %s35, 0
      %p56 = por %p54, %p55
      %p57 = scmp.ne.s32.totalorder %s43, %s44
      %p58 = scmp.eq.s32.totalorder %s36, 1
      %p59 = por %p57, %p58
      %p61 = scmp.ne.s32.totalorder %s44, %s60
      %p62 = scmp.eq.s32.totalorder %s36, 0
      %p63 = por %p61, %p62
      %s65 = sadd.s32 %s64, 1
      %p68 = scmp.eq.s32.totalorder %s30, 1
      %p69 = scmp.ne.s32.totalorder %s64, %s66
      %p70 = scmp.eq.s32.totalorder %s30, 0
      %p71 = por %p69, %p70
      %p72 = scmp.ne.s32.totalorder %s64, %s66
      %p73 = scmp.eq.s32.totalorder %s35, 1
      %p74 = por %p72, %p73
      %p75 = scmp.ne.s32.totalorder %s66, %s67
      %p76 = scmp.eq.s32.totalorder %s35, 0
      %p77 = por %p75, %p76
      %p78 = scmp.ne.s32.totalorder %s66, %s67
      %p79 = scmp.eq.s32.totalorder %s36, 1
      %p80 = por %p78, %p79
      %p82 = scmp.ne.s32.totalorder %s67, %s81
      %p83 = scmp.eq.s32.totalorder %s36, 0
      %p84 = por %p82, %p83
      %s86 = sadd.s32 %s85, 1
      %p89 = scmp.eq.s32.totalorder %s30, 1
      %p90 = scmp.ne.s32.totalorder %s85, %s87
      %p91 = scmp.eq.s32.totalorder %s30, 0
      %p92 = por %p90, %p91
      %p93 = scmp.ne.s32.totalorder %s85, %s87
      %p94 = scmp.eq.s32.totalorder %s35, 1
      %p95 = por %p93, %p94
      %p96 = scmp.ne.s32.totalorder %s87, %s88
      %p97 = scmp.eq.s32.totalorder %s35, 0
      %p98 = por %p96, %p97
      %p99 = scmp.ne.s32.totalorder %s87, %s88
      %p100 = scmp.eq.s32.totalorder %s36, 1
      %p101 = por %p99, %p100
      %p103 = scmp.ne.s32.totalorder %s88, %s102
      %p104 = scmp.eq.s32.totalorder %s36, 0
      %p105 = por %p103, %p104
      %s107 = sadd.s32 %s106, 1
      %p110 = scmp.eq.s32.totalorder %s30, 1
      %p111 = scmp.ne.s32.totalorder %s106, %s108
      %p112 = scmp.eq.s32.totalorder %s30, 0
      %p113 = por %p111, %p112
      %p114 = scmp.ne.s32.totalorder %s106, %s108
      %p115 = scmp.eq.s32.totalorder %s35, 1
      %p116 = por %p114, %p115
      %p117 = scmp.ne.s32.totalorder %s108, %s109
      %p118 = scmp.eq.s32.totalorder %s35, 0
      %p119 = por %p117, %p118
      %p120 = scmp.ne.s32.totalorder %s108, %s109
      %p121 = scmp.eq.s32.totalorder %s36, 1
      %p122 = por %p120, %p121
      %p124 = scmp.ne.s32.totalorder %s109, %s123
      %p125 = scmp.eq.s32.totalorder %s36, 0
      %p126 = por %p124, %p125
      %s128 = sadd.s32 %s127, 1
      %p131 = scmp.eq.s32.totalorder %s30, 1
      %p132 = scmp.ne.s32.totalorder %s127, %s129
      %p133 = scmp.eq.s32.totalorder %s30, 0
      %p134 = por %p132, %p133
      %p135 = scmp.ne.s32.totalorder %s127, %s129
      %p136 = scmp.eq.s32.totalorder %s35, 1
      %p137 = por %p135, %p136
      %p138 = scmp.ne.s32.totalorder %s129, %s130
      %p139 = scmp.eq.s32.totalorder %s35, 0
      %p140 = por %p138, %p139
      %p141 = scmp.ne.s32.totalorder %s129, %s130
      %p142 = scmp.eq.s32.totalorder %s36, 1
      %p143 = por %p141, %p142
      %p145 = scmp.ne.s32.totalorder %s130, %s144
      %p146 = scmp.eq.s32.totalorder %s36, 0
      %p147 = por %p145, %p146
      %s149 = sadd.s32 %s148, 1
      %p152 = scmp.eq.s32.totalorder %s30, 1
      %p153 = scmp.ne.s32.totalorder %s148, %s150
      %p154 = scmp.eq.s32.totalorder %s30, 0
      %p155 = por %p153, %p154
      %p156 = scmp.ne.s32.totalorder %s148, %s150
      %p157 = scmp.eq.s32.totalorder %s35, 1
      %p158 = por %p156, %p157
      %p159 = scmp.ne.s32.totalorder %s150, %s151
      %p160 = scmp.eq.s32.totalorder %s35, 0
      %p161 = por %p159, %p160
      %p162 = scmp.ne.s32.totalorder %s150, %s151
      %p163 = scmp.eq.s32.totalorder %s36, 1
      %p164 = por %p162, %p163
      %p166 = scmp.ne.s32.totalorder %s151, %s165
      %p167 = scmp.eq.s32.totalorder %s36, 0
      %p168 = por %p166, %p167
      %s170 = sadd.s32 %s169, 1
      %p173 = scmp.eq.s32.totalorder %s30, 1
      %p174 = scmp.ne.s32.totalorder %s169, %s171
      %p175 = scmp.eq.s32.totalorder %s30, 0
      %p176 = por %p174, %p175
      %p177 = scmp.ne.s32.totalorder %s169, %s171
      %p178 = scmp.eq.s32.totalorder %s35, 1
      %p179 = por %p177, %p178
      %p180 = scmp.ne.s32.totalorder %s171, %s172
      %p181 = scmp.eq.s32.totalorder %s35, 0
      %p182 = por %p180, %p181
      %p183 = scmp.ne.s32.totalorder %s171, %s172
      %p184 = scmp.eq.s32.totalorder %s36, 1
      %p185 = por %p183, %p184
      %p187 = scmp.ne.s32.totalorder %s172, %s186
      %p188 = scmp.eq.s32.totalorder %s36, 0
      %p189 = por %p187, %p188
      %s191 = sadd.s32 %s190, 1
      %p194 = scmp.eq.s32.totalorder %s30, 1
      %p195 = scmp.ne.s32.totalorder %s190, %s192
      %p196 = scmp.eq.s32.totalorder %s30, 0
      %p197 = por %p195, %p196
      %p198 = scmp.ne.s32.totalorder %s190, %s192
      %p199 = scmp.eq.s32.totalorder %s35, 1
      %p200 = por %p198, %p199
      %p201 = scmp.ne.s32.totalorder %s192, %s193
      %p202 = scmp.eq.s32.totalorder %s35, 0
      %p203 = por %p201, %p202
      %p204 = scmp.ne.s32.totalorder %s192, %s193
      %p205 = scmp.eq.s32.totalorder %s36, 1
      %p206 = por %p204, %p205
      %p208 = scmp.ne.s32.totalorder %s193, %s207
      %p209 = scmp.eq.s32.totalorder %s36, 0
      %p210 = por %p208, %p209
      %s212 = sadd.s32 %s211, 1
      %p215 = scmp.eq.s32.totalorder %s30, 1
      %p216 = scmp.ne.s32.totalorder %s211, %s213
      %p217 = scmp.eq.s32.totalorder %s30, 0
      %p218 = por %p216, %p217
      %p219 = scmp.ne.s32.totalorder %s211, %s213
      %p220 = scmp.eq.s32.totalorder %s35, 1
      %p221 = por %p219, %p220
      %p222 = scmp.ne.s32.totalorder %s213, %s214
      %p223 = scmp.eq.s32.totalorder %s35, 0
      %p224 = por %p222, %p223
      %p225 = scmp.ne.s32.totalorder %s213, %s214
      %p226 = scmp.eq.s32.totalorder %s36, 1
      %p227 = por %p225, %p226
      %p229 = scmp.ne.s32.totalorder %s214, %s228
      %p230 = scmp.eq.s32.totalorder %s36, 0
      %p231 = por %p229, %p230
      %s233 = sadd.s32 %s232, 1
      %p236 = scmp.eq.s32.totalorder %s30, 1
      %p237 = scmp.ne.s32.totalorder %s232, %s234
      %p238 = scmp.eq.s32.totalorder %s30, 0
      %p239 = por %p237, %p238
      %p240 = scmp.ne.s32.totalorder %s232, %s234
      %p241 = scmp.eq.s32.totalorder %s35, 1
      %p242 = por %p240, %p241
      %p243 = scmp.ne.s32.totalorder %s234, %s235
      %p244 = scmp.eq.s32.totalorder %s35, 0
      %p245 = por %p243, %p244
      %p246 = scmp.ne.s32.totalorder %s234, %s235
      %p247 = scmp.eq.s32.totalorder %s36, 1
      %p248 = por %p246, %p247
      %p250 = scmp.ne.s32.totalorder %s235, %s249
      %p251 = scmp.eq.s32.totalorder %s36, 0
      %p252 = por %p250, %p251
      %s254 = sadd.s32 %s253, 1
      %p257 = scmp.eq.s32.totalorder %s30, 1
      %p258 = scmp.ne.s32.totalorder %s253, %s255
      %p259 = scmp.eq.s32.totalorder %s30, 0
      %p260 = por %p258, %p259
      %p261 = scmp.ne.s32.totalorder %s253, %s255
      %p262 = scmp.eq.s32.totalorder %s35, 1
      %p263 = por %p261, %p262
      %p264 = scmp.ne.s32.totalorder %s255, %s256
      %p265 = scmp.eq.s32.totalorder %s35, 0
      %p266 = por %p264, %p265
      %p267 = scmp.ne.s32.totalorder %s255, %s256
      %p268 = scmp.eq.s32.totalorder %s36, 1
      %p269 = por %p267, %p268
      %p271 = scmp.ne.s32.totalorder %s256, %s270
      %p272 = scmp.eq.s32.totalorder %s36, 0
      %p273 = por %p271, %p272
      %s275 = sadd.s32 %s274, 1
      %p278 = scmp.eq.s32.totalorder %s30, 1
      %p279 = scmp.ne.s32.totalorder %s274, %s276
      %p280 = scmp.eq.s32.totalorder %s30, 0
      %p281 = por %p279, %p280
      %p282 = scmp.ne.s32.totalorder %s274, %s276
      %p283 = scmp.eq.s32.totalorder %s35, 1
      %p284 = por %p282, %p283
      %p285 = scmp.ne.s32.totalorder %s276, %s277
      %p286 = scmp.eq.s32.totalorder %s35, 0
      %p287 = por %p285, %p286
      %p288 = scmp.ne.s32.totalorder %s276, %s277
      %p289 = scmp.eq.s32.totalorder %s36, 1
      %p290 = por %p288, %p289
      %p292 = scmp.ne.s32.totalorder %s277, %s291
      %p293 = scmp.eq.s32.totalorder %s36, 0
      %p294 = por %p292, %p293
      %s296 = sadd.s32 %s295, 1
      %p299 = scmp.eq.s32.totalorder %s30, 1
      %p300 = scmp.ne.s32.totalorder %s295, %s297
      %p301 = scmp.eq.s32.totalorder %s30, 0
      %p302 = por %p300, %p301
      %p303 = scmp.ne.s32.totalorder %s295, %s297
      %p304 = scmp.eq.s32.totalorder %s35, 1
      %p305 = por %p303, %p304
      %p306 = scmp.ne.s32.totalorder %s297, %s298
      %p307 = scmp.eq.s32.totalorder %s35, 0
      %p308 = por %p306, %p307
      %p309 = scmp.ne.s32.totalorder %s297, %s298
      %p310 = scmp.eq.s32.totalorder %s36, 1
      %p311 = por %p309, %p310
      %p313 = scmp.ne.s32.totalorder %s298, %s312
      %p314 = scmp.eq.s32.totalorder %s36, 0
      %p315 = por %p313, %p314
      %s317 = sadd.s32 %s316, 1
      %p320 = scmp.eq.s32.totalorder %s30, 1
      %p321 = scmp.ne.s32.totalorder %s316, %s318
      %p322 = scmp.eq.s32.totalorder %s30, 0
      %p323 = por %p321, %p322
      %p324 = scmp.ne.s32.totalorder %s316, %s318
      %p325 = scmp.eq.s32.totalorder %s35, 1
      %p326 = por %p324, %p325
      %p327 = scmp.ne.s32.totalorder %s318, %s319
      %p328 = scmp.eq.s32.totalorder %s35, 0
      %p329 = por %p327, %p328
      %p330 = scmp.ne.s32.totalorder %s318, %s319
      %p331 = scmp.eq.s32.totalorder %s36, 1
      %p332 = por %p330, %p331
      %p334 = scmp.ne.s32.totalorder %s319, %s333
      %p335 = scmp.eq.s32.totalorder %s36, 0
      %p336 = por %p334, %p335
      %s338 = sadd.s32 %s337, 1
      %p341 = scmp.eq.s32.totalorder %s30, 1
      %p342 = scmp.ne.s32.totalorder %s337, %s339
      %p343 = scmp.eq.s32.totalorder %s30, 0
      %p344 = por %p342, %p343
      %p345 = scmp.ne.s32.totalorder %s337, %s339
      %p346 = scmp.eq.s32.totalorder %s35, 1
      %p347 = por %p345, %p346
      %p348 = scmp.ne.s32.totalorder %s339, %s340
      %p349 = scmp.eq.s32.totalorder %s35, 0
      %p350 = por %p348, %p349
      %p351 = scmp.ne.s32.totalorder %s339, %s340
      %p352 = scmp.eq.s32.totalorder %s36, 1
      %p353 = por %p351, %p352
      %p355 = scmp.ne.s32.totalorder %s340, %s354
      %p356 = scmp.eq.s32.totalorder %s36, 0
      %p357 = por %p355, %p356
      %s359 = sadd.s32 %s358, 1
      %p362 = scmp.eq.s32.totalorder %s30, 1
      %p363 = scmp.ne.s32.totalorder %s358, %s360
      %p364 = scmp.eq.s32.totalorder %s30, 0
      %p365 = por %p363, %p364
      %p366 = scmp.ne.s32.totalorder %s358, %s360
      %p367 = scmp.eq.s32.totalorder %s35, 1
      %p368 = por %p366, %p367
      %p369 = scmp.ne.s32.totalorder %s360, %s361
      %p370 = scmp.eq.s32.totalorder %s35, 0
      %p371 = por %p369, %p370
      %p372 = scmp.ne.s32.totalorder %s360, %s361
      %p373 = scmp.eq.s32.totalorder %s36, 1
      %p374 = por %p372, %p373
      %p376 = scmp.ne.s32.totalorder %s361, %s375
      %p377 = scmp.eq.s32.totalorder %s36, 0
      %p378 = por %p376, %p377
      %s380 = sadd.s32 %s379, 1
      %p383 = scmp.eq.s32.totalorder %s30, 1
      %p384 = scmp.ne.s32.totalorder %s379, %s381
      %p385 = scmp.eq.s32.totalorder %s30, 0
      %p386 = por %p384, %p385
      %p387 = scmp.ne.s32.totalorder %s379, %s381
      %p388 = scmp.eq.s32.totalorder %s35, 1
      %p389 = por %p387, %p388
      %p390 = scmp.ne.s32.totalorder %s381, %s382
      %p391 = scmp.eq.s32.totalorder %s35, 0
      %p392 = por %p390, %p391
      %p393 = scmp.ne.s32.totalorder %s381, %s382
      %p394 = scmp.eq.s32.totalorder %s36, 1
      %p395 = por %p393, %p394
      %p397 = scmp.ne.s32.totalorder %s382, %s396
      %p398 = scmp.eq.s32.totalorder %s36, 0
      %p399 = por %p397, %p398
      %s401 = sadd.s32 %s400, 1
      %p404 = scmp.eq.s32.totalorder %s30, 1
      %p405 = scmp.ne.s32.totalorder %s400, %s402
      %p406 = scmp.eq.s32.totalorder %s30, 0
      %p407 = por %p405, %p406
      %p408 = scmp.ne.s32.totalorder %s400, %s402
      %p409 = scmp.eq.s32.totalorder %s35, 1
      %p410 = por %p408, %p409
      %p411 = scmp.ne.s32.totalorder %s402, %s403
      %p412 = scmp.eq.s32.totalorder %s35, 0
      %p413 = por %p411, %p412
      %p414 = scmp.ne.s32.totalorder %s402, %s403
      %p415 = scmp.eq.s32.totalorder %s36, 1
      %p416 = por %p414, %p415
      %p418 = scmp.ne.s32.totalorder %s403, %s417
      %p419 = scmp.eq.s32.totalorder %s36, 0
      %p420 = por %p418, %p419
      %s422 = sadd.s32 %s421, 1
      %p425 = scmp.eq.s32.totalorder %s30, 1
      %p426 = scmp.ne.s32.totalorder %s421, %s423
      %p427 = scmp.eq.s32.totalorder %s30, 0
      %p428 = por %p426, %p427
      %p429 = scmp.ne.s32.totalorder %s421, %s423
      %p430 = scmp.eq.s32.totalorder %s35, 1
      %p431 = por %p429, %p430
      %p432 = scmp.ne.s32.totalorder %s423, %s424
      %p433 = scmp.eq.s32.totalorder %s35, 0
      %p434 = por %p432, %p433
      %p435 = scmp.ne.s32.totalorder %s423, %s424
      %p436 = scmp.eq.s32.totalorder %s36, 1
      %p437 = por %p435, %p436
      %p439 = scmp.ne.s32.totalorder %s424, %s438
      %p440 = scmp.eq.s32.totalorder %s36, 0
      %p441 = por %p439, %p440
      %s442 = ssub.s32 %s30, %s37
      %p443 = scmp.eq.s32.totalorder %s442, 0
      %s445 = sadd.s32 %s444, 1
      %s446 = scalar_select %p443, %s444, %s445
      %p449 = pneg %p443
      %p450 = scmp.eq.s32.totalorder %s30, 1
      %p451 = por %p449, %p450
      %p452 = scmp.ne.s32.totalorder %s444, %s447
      %p453 = scmp.eq.s32.totalorder %s30, 0
      %p454 = por %p452, %p453
      %p455 = scmp.ne.s32.totalorder %s444, %s447
      %p456 = scmp.eq.s32.totalorder %s35, 1
      %p457 = por %p455, %p456
      %p458 = scmp.ne.s32.totalorder %s447, %s448
      %p459 = scmp.eq.s32.totalorder %s35, 0
      %p460 = por %p458, %p459
      %p461 = scmp.ne.s32.totalorder %s447, %s448
      %p462 = scmp.eq.s32.totalorder %s36, 1
      %p463 = por %p461, %p462
      %p465 = scmp.ne.s32.totalorder %s448, %s464
      %p466 = scmp.eq.s32.totalorder %s36, 0
      %p467 = por %p465, %p466
      %p468 = scmp.le.s32.totalorder 1, %s30
      %p469 = scmp.lt.s32.totalorder %s30, 3
      %p470 = pnand %p468, %p469
      %p471 = pneg %p470
      // Predicated region
      $region9: #{alpha_slow_forward.1} parent=5 // pred_check
        _
      $region10: #{alpha_slow_forward.1} parent=5 // pred_check_branch
        %473 = sbr.rel (%p470) target = $region12
      $region11: #{alpha_slow_forward.1} parent=5 // pred_region
        %s474 = ssub.s32 %s30, 1
        // Predicated region
        $region13: #{alpha_slow_forward.1} parent=11 // pred_check
          %p475 = pneg %p77
        $region14: #{alpha_slow_forward.1} parent=11 // pred_check_branch
          %477 = sbr.rel (%p475) target = $region16
        $region15: #{alpha_slow_forward.1} parent=11 // pred_region
          %s479 = ssub.s32 960, 960
          %480 = vsyncadd [#allocation3], %s479
          %s481 = sshll.u32 [#allocation2], 4
          %s482 = int_to_ptr.vmem [resolvable:$true] %s481
          %487 = dma.hbm_to_vmem [thread:$0]  %s1, 960, %s482, [#allocation3], 192, 192, 12
        $region16: #{alpha_slow_forward.1} parent=11 // pred_fallthru
          _
        // Predicated region
        $region17: #{alpha_slow_forward.1} parent=11 // pred_check
          %p488 = pneg %p98
        $region18: #{alpha_slow_forward.1} parent=11 // pred_check_branch
          %490 = sbr.rel (%p488) target = $region20
        $region19: #{alpha_slow_forward.1} parent=11 // pred_region
          %s492 = ssub.s32 6144, 6144
          %493 = vsyncadd [#allocation5], %s492
          %s494 = sshll.u32 [#allocation4], 4
          %s495 = int_to_ptr.vmem [resolvable:$true] %s494
          %500 = dma.hbm_to_vmem [thread:$0]  %s2, 6144, %s495, [#allocation5], 128, 128, 8
        $region20: #{alpha_slow_forward.1} parent=11 // pred_fallthru
          _
        // Predicated region
        $region21: #{alpha_slow_forward.1} parent=11 // pred_check
          %p501 = pneg %p119
        $region22: #{alpha_slow_forward.1} parent=11 // pred_check_branch
          %503 = sbr.rel (%p501) target = $region24
        $region23: #{alpha_slow_forward.1} parent=11 // pred_region
          %s505 = ssub.s32 2048, 2048
          %506 = vsyncadd [#allocation5], %s505
          %s507 = sshll.u32 [#allocation6], 4
          %s508 = int_to_ptr.vmem [resolvable:$true] %s507
          %513 = dma.hbm_to_vmem [thread:$0]  %s3, 2048, %s508, [#allocation5], 64, 64, 4
        $region24: #{alpha_slow_forward.1} parent=11 // pred_fallthru
          _
        // Predicated region
        $region25: #{alpha_slow_forward.1} parent=11 // pred_check
          %p514 = pneg %p140
        $region26: #{alpha_slow_forward.1} parent=11 // pred_check_branch
          %516 = sbr.rel (%p514) target = $region28
        $region27: #{alpha_slow_forward.1} parent=11 // pred_region
          %s518 = ssub.s32 1024, 1024
          %519 = vsyncadd [#allocation8], %s518
          %s520 = sshll.u32 [#allocation7], 4
          %s521 = int_to_ptr.vmem [resolvable:$true] %s520
          %526 = dma.hbm_to_vmem [thread:$0]  %s4, 1024, %s521, [#allocation8], 64, 64, 4
        $region28: #{alpha_slow_forward.1} parent=11 // pred_fallthru
          _
        // Predicated region
        $region29: #{alpha_slow_forward.1} parent=11 // pred_check
          %p527 = pneg %p161
        $region30: #{alpha_slow_forward.1} parent=11 // pred_check_branch
          %529 = sbr.rel (%p527) target = $region32
        $region31: #{alpha_slow_forward.1} parent=11 // pred_region
          _
        $region32: #{alpha_slow_forward.1} parent=11 // pred_fallthru
          _
        // Predicated region
        $region33: #{alpha_slow_forward.1} parent=11 // pred_check
          %p530 = pneg %p182
        $region34: #{alpha_slow_forward.1} parent=11 // pred_check_branch
          %532 = sbr.rel (%p530) target = $region36
        $region35: #{alpha_slow_forward.1} parent=11 // pred_region
          %s534 = ssub.s32 1024, 1024
          %535 = vsyncadd [#allocation8], %s534
          %s536 = sshll.u32 [#allocation9], 4
          %s537 = int_to_ptr.vmem [resolvable:$true] %s536
          %542 = dma.hbm_to_vmem [thread:$0]  %s6, 1024, %s537, [#allocation8], 64, 64, 4
        $region36: #{alpha_slow_forward.1} parent=11 // pred_fallthru
          _
        // Predicated region
        $region37: #{alpha_slow_forward.1} parent=11 // pred_check
          %p543 = pneg %p203
        $region38: #{alpha_slow_forward.1} parent=11 // pred_check_branch
          %545 = sbr.rel (%p543) target = $region40
        $region39: #{alpha_slow_forward.1} parent=11 // pred_region
          %s547 = ssub.s32 1024, 1024
          %548 = vsyncadd [#allocation11], %s547
          %s549 = sshll.u32 [#allocation10], 4
          %s550 = int_to_ptr.vmem [resolvable:$true] %s549
          %555 = dma.hbm_to_vmem [thread:$0]  %s7, 1024, %s550, [#allocation11], 64, 64, 4
        $region40: #{alpha_slow_forward.1} parent=11 // pred_fallthru
          _
        // Predicated region
        $region41: #{alpha_slow_forward.1} parent=11 // pred_check
          %p556 = pneg %p224
        $region42: #{alpha_slow_forward.1} parent=11 // pred_check_branch
          %558 = sbr.rel (%p556) target = $region44
        $region43: #{alpha_slow_forward.1} parent=11 // pred_region
          %s560 = ssub.s32 1024, 1024
          %561 = vsyncadd [#allocation11], %s560
          %s562 = sshll.u32 [#allocation12], 4
          %s563 = int_to_ptr.vmem [resolvable:$true] %s562
          %568 = dma.hbm_to_vmem [thread:$0]  %s8, 1024, %s563, [#allocation11], 64, 64, 4
        $region44: #{alpha_slow_forward.1} parent=11 // pred_fallthru
          _
        // Predicated region
        $region45: #{alpha_slow_forward.1} parent=11 // pred_check
          %p569 = pneg %p245
        $region46: #{alpha_slow_forward.1} parent=11 // pred_check_branch
          %571 = sbr.rel (%p569) target = $region48
        $region47: #{alpha_slow_forward.1} parent=11 // pred_region
          %s573 = ssub.s32 1024, 1024
          %574 = vsyncadd [#allocation14], %s573
          %s575 = sshll.u32 [#allocation13], 4
          %s576 = int_to_ptr.vmem [resolvable:$true] %s575
          %581 = dma.hbm_to_vmem [thread:$0]  %s9, 1024, %s576, [#allocation14], 64, 64, 4
        $region48: #{alpha_slow_forward.1} parent=11 // pred_fallthru
          _
        // Predicated region
        $region49: #{alpha_slow_forward.1} parent=11 // pred_check
          %p582 = pneg %p266
        $region50: #{alpha_slow_forward.1} parent=11 // pred_check_branch
          %584 = sbr.rel (%p582) target = $region52
        $region51: #{alpha_slow_forward.1} parent=11 // pred_region
          _
        $region52: #{alpha_slow_forward.1} parent=11 // pred_fallthru
          _
        // Predicated region
        $region53: #{alpha_slow_forward.1} parent=11 // pred_check
          %p585 = pneg %p287
        $region54: #{alpha_slow_forward.1} parent=11 // pred_check_branch
          %587 = sbr.rel (%p585) target = $region56
        $region55: #{alpha_slow_forward.1} parent=11 // pred_region
          _
        $region56: #{alpha_slow_forward.1} parent=11 // pred_fallthru
          _
        // Predicated region
        $region57: #{alpha_slow_forward.1} parent=11 // pred_check
          %p588 = pneg %p308
        $region58: #{alpha_slow_forward.1} parent=11 // pred_check_branch
          %590 = sbr.rel (%p588) target = $region60
        $region59: #{alpha_slow_forward.1} parent=11 // pred_region
          _
        $region60: #{alpha_slow_forward.1} parent=11 // pred_fallthru
          _
        // Predicated region
        $region61: #{alpha_slow_forward.1} parent=11 // pred_check
          %p591 = pneg %p329
        $region62: #{alpha_slow_forward.1} parent=11 // pred_check_branch
          %593 = sbr.rel (%p591) target = $region64
        $region63: #{alpha_slow_forward.1} parent=11 // pred_region
          _
        $region64: #{alpha_slow_forward.1} parent=11 // pred_fallthru
          _
        // Predicated region
        $region65: #{alpha_slow_forward.1} parent=11 // pred_check
          %p594 = pneg %p350
        $region66: #{alpha_slow_forward.1} parent=11 // pred_check_branch
          %596 = sbr.rel (%p594) target = $region68
        $region67: #{alpha_slow_forward.1} parent=11 // pred_region
          _
        $region68: #{alpha_slow_forward.1} parent=11 // pred_fallthru
          _
        // Predicated region
        $region69: #{alpha_slow_forward.1} parent=11 // pred_check
          %p597 = pneg %p371
        $region70: #{alpha_slow_forward.1} parent=11 // pred_check_branch
          %599 = sbr.rel (%p597) target = $region72
        $region71: #{alpha_slow_forward.1} parent=11 // pred_region
          _
        $region72: #{alpha_slow_forward.1} parent=11 // pred_fallthru
          _
        // Predicated region
        $region73: #{alpha_slow_forward.1} parent=11 // pred_check
          %p600 = pneg %p392
        $region74: #{alpha_slow_forward.1} parent=11 // pred_check_branch
          %602 = sbr.rel (%p600) target = $region76
        $region75: #{alpha_slow_forward.1} parent=11 // pred_region
          _
        $region76: #{alpha_slow_forward.1} parent=11 // pred_fallthru
          _
        // Predicated region
        $region77: #{alpha_slow_forward.1} parent=11 // pred_check
          %p603 = pneg %p413
        $region78: #{alpha_slow_forward.1} parent=11 // pred_check_branch
          %605 = sbr.rel (%p603) target = $region80
        $region79: #{alpha_slow_forward.1} parent=11 // pred_region
          _
        $region80: #{alpha_slow_forward.1} parent=11 // pred_fallthru
          _
        // Predicated region
        $region81: #{alpha_slow_forward.1} parent=11 // pred_check
          %p606 = pneg %p434
        $region82: #{alpha_slow_forward.1} parent=11 // pred_check_branch
          %608 = sbr.rel (%p606) target = $region84
        $region83: #{alpha_slow_forward.1} parent=11 // pred_region
          _
        $region84: #{alpha_slow_forward.1} parent=11 // pred_fallthru
          _
      $region12: #{alpha_slow_forward.1} parent=5 // pred_fallthru
        _
      %p609 = scmp.lt.s32.totalorder %s30, 2
      // Predicated region
      $region85: #{alpha_slow_forward.1} parent=5 // pred_check
        %p610 = pneg %p609
      $region86: #{alpha_slow_forward.1} parent=5 // pred_check_branch
        %612 = sbr.rel (%p610) target = $region88
      $region87: #{alpha_slow_forward.1} parent=5 // pred_region
        // Predicated region
        $region89: #{alpha_slow_forward.1} parent=87 // pred_check
          %p613 = pneg %p50
        $region90: #{alpha_slow_forward.1} parent=87 // pred_check_branch
          %615 = sbr.rel (%p613) target = $region92
        $region91: #{alpha_slow_forward.1} parent=87 // pred_region
          %p616 = scmp.lt.s32.totalorder %s30, 1
          %s617 = scalar_select %p616, %s30, 1
          %s618 = smul.addr %s617, 4
          %s619 = scalar_lea.vmem %s0, %s618
        $region92: #{alpha_slow_forward.1} parent=87 // pred_fallthru
          _
      $region88: #{alpha_slow_forward.1} parent=5 // pred_fallthru
        _
      %p620 = scmp.le.s32.totalorder 1, %s30
      %p621 = scmp.lt.s32.totalorder %s30, 3
      %p622 = pnand %p620, %p621
      %p623 = pneg %p622
      // Predicated region
      $region93: #{alpha_slow_forward.1} parent=5 // pred_check
        _
      $region94: #{alpha_slow_forward.1} parent=5 // pred_check_branch
        %625 = sbr.rel (%p622) target = $region96
      $region95: #{alpha_slow_forward.1} parent=5 // pred_region
        %s626 = ssub.s32 %s30, 1
        // Predicated region
        $region97: #{alpha_slow_forward.1} parent=95 // pred_check
          %p627 = pneg %p77
        $region98: #{alpha_slow_forward.1} parent=95 // pred_check_branch
          %629 = sbr.rel (%p627) target = $region100
        $region99: #{alpha_slow_forward.1} parent=95 // pred_region
          %630 = dma.done [#allocation3], 960
        $region100: #{alpha_slow_forward.1} parent=95 // pred_fallthru
          _
        // Predicated region
        $region101: #{alpha_slow_forward.1} parent=95 // pred_check
          %p631 = pneg %p98
        $region102: #{alpha_slow_forward.1} parent=95 // pred_check_branch
          %633 = sbr.rel (%p631) target = $region104
        $region103: #{alpha_slow_forward.1} parent=95 // pred_region
          %634 = dma.done [#allocation5], 6144
        $region104: #{alpha_slow_forward.1} parent=95 // pred_fallthru
          _
        // Predicated region
        $region105: #{alpha_slow_forward.1} parent=95 // pred_check
          %p635 = pneg %p119
        $region106: #{alpha_slow_forward.1} parent=95 // pred_check_branch
          %637 = sbr.rel (%p635) target = $region108
        $region107: #{alpha_slow_forward.1} parent=95 // pred_region
          %638 = dma.done [#allocation5], 2048
        $region108: #{alpha_slow_forward.1} parent=95 // pred_fallthru
          _
        // Predicated region
        $region109: #{alpha_slow_forward.1} parent=95 // pred_check
          %p639 = pneg %p140
        $region110: #{alpha_slow_forward.1} parent=95 // pred_check_branch
          %641 = sbr.rel (%p639) target = $region112
        $region111: #{alpha_slow_forward.1} parent=95 // pred_region
          %642 = dma.done [#allocation8], 1024
        $region112: #{alpha_slow_forward.1} parent=95 // pred_fallthru
          _
        // Predicated region
        $region113: #{alpha_slow_forward.1} parent=95 // pred_check
          %p643 = pneg %p182
        $region114: #{alpha_slow_forward.1} parent=95 // pred_check_branch
          %645 = sbr.rel (%p643) target = $region116
        $region115: #{alpha_slow_forward.1} parent=95 // pred_region
          %646 = dma.done [#allocation8], 1024
        $region116: #{alpha_slow_forward.1} parent=95 // pred_fallthru
          _
        // Predicated region
        $region117: #{alpha_slow_forward.1} parent=95 // pred_check
          %p647 = pneg %p203
        $region118: #{alpha_slow_forward.1} parent=95 // pred_check_branch
          %649 = sbr.rel (%p647) target = $region120
        $region119: #{alpha_slow_forward.1} parent=95 // pred_region
          %650 = dma.done [#allocation11], 1024
        $region120: #{alpha_slow_forward.1} parent=95 // pred_fallthru
          _
        // Predicated region
        $region121: #{alpha_slow_forward.1} parent=95 // pred_check
          %p651 = pneg %p224
        $region122: #{alpha_slow_forward.1} parent=95 // pred_check_branch
          %653 = sbr.rel (%p651) target = $region124
        $region123: #{alpha_slow_forward.1} parent=95 // pred_region
          %654 = dma.done [#allocation11], 1024
        $region124: #{alpha_slow_forward.1} parent=95 // pred_fallthru
          _
        // Predicated region
        $region125: #{alpha_slow_forward.1} parent=95 // pred_check
          %p655 = pneg %p245
        $region126: #{alpha_slow_forward.1} parent=95 // pred_check_branch
          %657 = sbr.rel (%p655) target = $region128
        $region127: #{alpha_slow_forward.1} parent=95 // pred_region
          %658 = dma.done [#allocation14], 1024
        $region128: #{alpha_slow_forward.1} parent=95 // pred_fallthru
          _
        %p659 = scmp.lt.s32.totalorder %s35, 1
        %s660 = scalar_select %p659, %s35, 1
        %s661 = smul.addr %s660, 4
        %s662 = scalar_lea.vmem %s0, %s661
        %p663 = pneg %p56
        %p664 = pneg %p53
        %p665 = pneg %p77
        %p666 = pneg %p74
        %p667 = pneg %p98
        %p668 = pneg %p95
        %p669 = pneg %p119
        %p670 = pneg %p116
        %p671 = pneg %p140
        %p672 = pneg %p137
        %p673 = pneg %p161
        %p674 = pneg %p158
        %p675 = pneg %p182
        %p676 = pneg %p179
        %p677 = pneg %p203
        %p678 = pneg %p200
        %p679 = pneg %p224
        %p680 = pneg %p221
        %p681 = pneg %p245
        %p682 = pneg %p242
        %p683 = pneg %p266
        %p684 = pneg %p263
        %p685 = pneg %p287
        %p686 = pneg %p284
        %p687 = pneg %p308
        %p688 = pneg %p305
        %p689 = pneg %p329
        %p690 = pneg %p326
        %p691 = pneg %p350
        %p692 = pneg %p347
        %p693 = pneg %p371
        %p694 = pneg %p368
        %p695 = pneg %p392
        %p696 = pneg %p389
        %p697 = pneg %p413
        %p698 = pneg %p410
        %p699 = pneg %p434
        %p700 = pneg %p431
        %p701 = pneg %p460
        %p702 = pneg %p457
        %p703 = scmp.lt.s32.totalorder %s35, 1
        %s704 = scalar_select %p703, %s35, 1
        %s705 = smul.addr %s704, 8
        %s706 = scalar_lea.vmem %s19, %s705
        %p707 = scmp.lt.s32.totalorder %s35, 1
        %s708 = scalar_select %p707, %s35, 1
        %s709 = smul.addr %s708, 4
        %s710 = scalar_lea.vmem %s0, %s709
        %p711 = scmp.lt.s32.totalorder %s35, 1
        %s712 = scalar_select %p711, %s35, 1
        %s713 = smul.addr %s712, 8
        %s714 = scalar_lea.vmem %s19, %s713
        %v716 = vld [vmem:[%s710] sm:$0xf]
        %v717 = vld [vmem:[#allocation2] sm:$0xff]
        %v718 = vld [vmem:[#allocation2 + $0x8] sm:$0xf]
        %v719 = vld [vmem:[#allocation2 + $0xc] sm:$0xff]
        %v720 = vld [vmem:[#allocation2 + $0x14] sm:$0xf]
        %v721 = vld [vmem:[#allocation2 + $0x18] sm:$0xff]
        %v722 = vld [vmem:[#allocation2 + $0x20] sm:$0xf]
        %v723 = vld [vmem:[#allocation2 + $0x24] sm:$0xff]
        %v724 = vld [vmem:[#allocation2 + $0x2c] sm:$0xf]
        %v725 = vld [vmem:[#allocation2 + $0x30] sm:$0xff]
        %v726 = vld [vmem:[#allocation2 + $0x38] sm:$0xf]
        %v727 = vld [vmem:[%s10] sm:$0x7]
        %v729 = vlaneseq
        %v730 = vshrl.u32 %v729, 7
        %v731 = vsub.s32 0, %v730
        %v732 = vrot.slane %v727, %v731
        %v733 = vlaneseq
        %v734 = vshrl.u32 %v733, 7
        %v735 = vsub.s32 1, %v734
        %v736 = vrot.slane %v727, %v735
        %v737 = vlaneseq
        %v738 = vshrl.u32 %v737, 7
        %v739 = vsub.s32 2, %v738
        %v740 = vrot.slane %v727, %v739
        %v754 = vunpack.c.l.b16 %v717
        %v755 = vunpack.c.h.b16 %v717
        %v756 = vunpack.c.l.b16 %v718
        %v757 = vunpack.c.l.b16 %v719
        %v758 = vunpack.c.h.b16 %v719
        %v759 = vunpack.c.l.b16 %v720
        %v760 = vunpack.c.l.b16 %v721
        %v761 = vunpack.c.h.b16 %v721
        %v762 = vunpack.c.l.b16 %v722
        %v763 = vunpack.c.l.b16 %v723
        %v764 = vunpack.c.h.b16 %v723
        %v765 = vunpack.c.l.b16 %v724
        %v766 = vunpack.c.l.b16 %v725
        %v767 = vunpack.c.h.b16 %v725
        %v768 = vunpack.c.l.b16 %v726
        %v769 = vpack.c.b16 %v757, %v754
        %v770 = vpack.c.b16 %v758, %v755
        %v771 = vpack.c.b16 %v759, %v756
        %v772 = vpack.c.b16 %v763, %v760
        %v773 = vpack.c.b16 %v764, %v761
        %v774 = vpack.c.b16 %v765, %v762
        %v775 = vpack.c.b16 %v766, %v766
        %v776 = vpack.c.b16 %v767, %v767
        %v777 = vpack.c.b16 %v768, %v768
        %vm784 = vcmask 326656
        %v786 = vsel %vm784, %v716, 0
        %vm788 = vcmask 1043456
        %v790 = vsel %vm788, %v775, 0
        %v793 = vsel %vm788, %v776, 0
        %v796 = vsel %vm788, %v777, 0
        %798 = vmatprep.subr.bf16.mxu0 %v770
        %799 = vmatpush1.bf16.msra.mxu0 %v769
        %800 = vmatprep.subr.bf16.mxu0 %v773
        %801 = vmatpush1.bf16.msra.mxu0 %v772
        %802 = vmatprep.subr.bf16.mxu0 %v793
        %803 = vmatpush1.bf16.msra.mxu0 %v790
        %804 = vmatprep.subr.bf16.mxu0 0
        %805 = vmatpush1.bf16.msra.mxu0 0
        %806 = vmatprep.subr.bf16.mxu0 0
        %807 = vmatpush1.bf16.msra.mxu0 0
        %808 = vmatprep.subr.bf16.mxu0 0
        %809 = vmatpush1.bf16.msra.mxu0 0
        %810 = vmatprep.subr.bf16.mxu0 0
        %811 = vmatpush1.bf16.msra.mxu0 0
        %812 = vmatprep.subr.bf16.mxu0 0
        %813 = vmatpush1.bf16.msra.mxu0 0
        %814 = vmatprep.subr.bf16.mxu0 0
        %815 = vmatpush1.bf16.msra.mxu0 0
        %816 = vmatprep.subr.bf16.mxu0 0
        %817 = vmatpush1.bf16.msra.mxu0 0
        %818 = vmatprep.subr.bf16.mxu0 0
        %819 = vmatpush1.bf16.msra.mxu0 0
        %820 = vmatprep.subr.bf16.mxu0 0
        %821 = vmatpush1.bf16.msra.mxu0 0
        %822 = vmatprep.subr.bf16.mxu0 0
        %823 = vmatpush1.bf16.msra.mxu0 0
        %824 = vmatprep.subr.bf16.mxu0 0
        %825 = vmatpush1.bf16.msra.mxu0 0
        %826 = vmatprep.subr.bf16.mxu0 0
        %827 = vmatpush1.bf16.msra.mxu0 0
        %828 = vmatprep.subr.bf16.mxu0 0
        %829 = vmatpush1.bf16.msra.mxu0 0
        %830 = vmatprep.mubr.bf16.mxu0 0
        %831 = vmatmul.mubr.bf16.gmra.mrb[0].mxu0 %v786
        %v832 = vpop.f32.mrb[0].mxu0
        %v833 = vadd.f32 %v732, %v832
        %v834 = vpop.f32.mrb[0].mxu0
        %v835 = vadd.f32 %v736, %v834
        %v836 = vpop.f32.mrb[0].mxu0
        %v837 = vpop.f32.mrb[0].mxu0
        %838 = vdwg.mxu0
        %839 = vmatprep.subr.bf16.mxu0 0
        %840 = vmatpush1.bf16.msra.mxu0 %v771
        %841 = vmatprep.subr.bf16.mxu0 0
        %842 = vmatpush1.bf16.msra.mxu0 %v774
        %843 = vmatprep.subr.bf16.mxu0 0
        %844 = vmatpush1.bf16.msra.mxu0 %v796
        %845 = vmatprep.subr.bf16.mxu0 0
        %846 = vmatpush1.bf16.msra.mxu0 0
        %847 = vmatprep.subr.bf16.mxu0 0
        %848 = vmatpush1.bf16.msra.mxu0 0
        %849 = vmatprep.subr.bf16.mxu0 0
        %850 = vmatpush1.bf16.msra.mxu0 0
        %851 = vmatprep.subr.bf16.mxu0 0
        %852 = vmatpush1.bf16.msra.mxu0 0
        %853 = vmatprep.subr.bf16.mxu0 0
        %854 = vmatpush1.bf16.msra.mxu0 0
        %855 = vmatprep.subr.bf16.mxu0 0
        %856 = vmatpush1.bf16.msra.mxu0 0
        %857 = vmatprep.subr.bf16.mxu0 0
        %858 = vmatpush1.bf16.msra.mxu0 0
        %859 = vmatprep.subr.bf16.mxu0 0
        %860 = vmatpush1.bf16.msra.mxu0 0
        %861 = vmatprep.subr.bf16.mxu0 0
        %862 = vmatpush1.bf16.msra.mxu0 0
        %863 = vmatprep.subr.bf16.mxu0 0
        %864 = vmatpush1.bf16.msra.mxu0 0
        %865 = vmatprep.subr.bf16.mxu0 0
        %866 = vmatpush1.bf16.msra.mxu0 0
        %867 = vmatprep.subr.bf16.mxu0 0
        %868 = vmatpush1.bf16.msra.mxu0 0
        %869 = vmatprep.subr.bf16.mxu0 0
        %870 = vmatpush1.bf16.msra.mxu0 0
        %871 = vmatprep.mubr.bf16.mxu0 0
        %872 = vmatmul.mubr.bf16.gmra.mrb[0].mxu0 %v786
        %v873 = vpop.f32.mrb[0].mxu0
        %v874 = vadd.f32 %v740, %v873
        %v875 = vpop.f32.mrb[0].mxu0
        %v876 = vpop.f32.mrb[0].mxu0
        %v877 = vpop.f32.mrb[0].mxu0
        %878 = vdwg.mxu0
        %v879 = vmax.f32 %v833, 0.0
        %v880 = vmax.f32 %v835, 0.0
        %v881 = vmax.f32 %v874, 0.0
        %v882 = vpack.c.bf16 %v879, %v879
        %v883 = vpack.c.bf16 %v880, %v880
        %v884 = vpack.c.bf16 %v881, %v881
        %v885 = vld [vmem:[#allocation4] sm:$0xff]
        %v886 = vld [vmem:[#allocation4 + $0x8] sm:$0xff]
        %v887 = vld [vmem:[#allocation4 + $0x10] sm:$0xff]
        %v888 = vld [vmem:[#allocation4 + $0x18] sm:$0xff]
        %v889 = vld [vmem:[#allocation4 + $0x20] sm:$0xff]
        %v890 = vld [vmem:[#allocation4 + $0x28] sm:$0xff]
        %v891 = vld [vmem:[#allocation4 + $0x30] sm:$0xff]
        %v892 = vld [vmem:[#allocation4 + $0x38] sm:$0xff]
        %v893 = vld [vmem:[#allocation4 + $0x40] sm:$0xff]
        %v894 = vld [vmem:[#allocation4 + $0x48] sm:$0xff]
        %v895 = vld [vmem:[#allocation4 + $0x50] sm:$0xff]
        %v896 = vld [vmem:[#allocation4 + $0x58] sm:$0xff]
        %v897 = vld [vmem:[#allocation4 + $0x60] sm:$0xff]
        %v898 = vld [vmem:[#allocation4 + $0x68] sm:$0xff]
        %v899 = vld [vmem:[#allocation4 + $0x70] sm:$0xff]
        %v900 = vld [vmem:[#allocation4 + $0x78] sm:$0xff]
        %v901 = vld [vmem:[#allocation4 + $0x80] sm:$0xff]
        %v902 = vld [vmem:[#allocation4 + $0x88] sm:$0xff]
        %v903 = vld [vmem:[#allocation4 + $0x90] sm:$0xff]
        %v904 = vld [vmem:[#allocation4 + $0x98] sm:$0xff]
        %v905 = vld [vmem:[#allocation4 + $0xa0] sm:$0xff]
        %v906 = vld [vmem:[#allocation4 + $0xa8] sm:$0xff]
        %v907 = vld [vmem:[#allocation4 + $0xb0] sm:$0xff]
        %v908 = vld [vmem:[#allocation4 + $0xb8] sm:$0xff]
        %v909 = vld [vmem:[#allocation4 + $0xc0] sm:$0xff]
        %v910 = vld [vmem:[#allocation4 + $0xc8] sm:$0xff]
        %v911 = vld [vmem:[#allocation4 + $0xd0] sm:$0xff]
        %v912 = vld [vmem:[#allocation4 + $0xd8] sm:$0xff]
        %v913 = vld [vmem:[#allocation4 + $0xe0] sm:$0xff]
        %v914 = vld [vmem:[#allocation4 + $0xe8] sm:$0xff]
        %v915 = vld [vmem:[#allocation4 + $0xf0] sm:$0xff]
        %v916 = vld [vmem:[#allocation4 + $0xf8] sm:$0xff]
        %v917 = vld [vmem:[#allocation4 + $0x100] sm:$0xff]
        %v918 = vld [vmem:[#allocation4 + $0x108] sm:$0xff]
        %v919 = vld [vmem:[#allocation4 + $0x110] sm:$0xff]
        %v920 = vld [vmem:[#allocation4 + $0x118] sm:$0xff]
        %v921 = vld [vmem:[#allocation4 + $0x120] sm:$0xff]
        %v922 = vld [vmem:[#allocation4 + $0x128] sm:$0xff]
        %v923 = vld [vmem:[#allocation4 + $0x130] sm:$0xff]
        %v924 = vld [vmem:[#allocation4 + $0x138] sm:$0xff]
        %v925 = vld [vmem:[#allocation4 + $0x140] sm:$0xff]
        %v926 = vld [vmem:[#allocation4 + $0x148] sm:$0xff]
        %v927 = vld [vmem:[#allocation4 + $0x150] sm:$0xff]
        %v928 = vld [vmem:[#allocation4 + $0x158] sm:$0xff]
        %v929 = vld [vmem:[#allocation4 + $0x160] sm:$0xff]
        %v930 = vld [vmem:[#allocation4 + $0x168] sm:$0xff]
        %v931 = vld [vmem:[#allocation4 + $0x170] sm:$0xff]
        %v932 = vld [vmem:[#allocation4 + $0x178] sm:$0xff]
        %v933 = vld [vmem:[%s11] sm:$0x3]
        %v935 = vlaneseq
        %v936 = vshrl.u32 %v935, 7
        %v937 = vsub.s32 0, %v936
        %v938 = vrot.slane %v933, %v937
        %v939 = vlaneseq
        %v940 = vshrl.u32 %v939, 7
        %v941 = vsub.s32 1, %v940
        %v942 = vrot.slane %v933, %v941
        %v993 = vunpack.c.l.b16 %v885
        %v994 = vunpack.c.h.b16 %v885
        %v995 = vunpack.c.l.b16 %v886
        %v996 = vunpack.c.h.b16 %v886
        %v997 = vunpack.c.l.b16 %v887
        %v998 = vunpack.c.h.b16 %v887
        %v999 = vunpack.c.l.b16 %v888
        %v1000 = vunpack.c.h.b16 %v888
        %v1001 = vunpack.c.l.b16 %v889
        %v1002 = vunpack.c.h.b16 %v889
        %v1003 = vunpack.c.l.b16 %v890
        %v1004 = vunpack.c.h.b16 %v890
        %v1005 = vunpack.c.l.b16 %v891
        %v1006 = vunpack.c.h.b16 %v891
        %v1007 = vunpack.c.l.b16 %v892
        %v1008 = vunpack.c.h.b16 %v892
        %v1009 = vunpack.c.l.b16 %v893
        %v1010 = vunpack.c.h.b16 %v893
        %v1011 = vunpack.c.l.b16 %v894
        %v1012 = vunpack.c.h.b16 %v894
        %v1013 = vunpack.c.l.b16 %v895
        %v1014 = vunpack.c.h.b16 %v895
        %v1015 = vunpack.c.l.b16 %v896
        %v1016 = vunpack.c.h.b16 %v896
        %v1017 = vunpack.c.l.b16 %v897
        %v1018 = vunpack.c.h.b16 %v897
        %v1019 = vunpack.c.l.b16 %v898
        %v1020 = vunpack.c.h.b16 %v898
        %v1021 = vunpack.c.l.b16 %v899
        %v1022 = vunpack.c.h.b16 %v899
        %v1023 = vunpack.c.l.b16 %v900
        %v1024 = vunpack.c.h.b16 %v900
        %v1025 = vunpack.c.l.b16 %v901
        %v1026 = vunpack.c.h.b16 %v901
        %v1027 = vunpack.c.l.b16 %v902
        %v1028 = vunpack.c.h.b16 %v902
        %v1029 = vunpack.c.l.b16 %v903
        %v1030 = vunpack.c.h.b16 %v903
        %v1031 = vunpack.c.l.b16 %v904
        %v1032 = vunpack.c.h.b16 %v904
        %v1033 = vunpack.c.l.b16 %v905
        %v1034 = vunpack.c.h.b16 %v905
        %v1035 = vunpack.c.l.b16 %v906
        %v1036 = vunpack.c.h.b16 %v906
        %v1037 = vunpack.c.l.b16 %v907
        %v1038 = vunpack.c.h.b16 %v907
        %v1039 = vunpack.c.l.b16 %v908
        %v1040 = vunpack.c.h.b16 %v908
        %v1041 = vunpack.c.l.b16 %v909
        %v1042 = vunpack.c.h.b16 %v909
        %v1043 = vunpack.c.l.b16 %v910
        %v1044 = vunpack.c.h.b16 %v910
        %v1045 = vunpack.c.l.b16 %v911
        %v1046 = vunpack.c.h.b16 %v911
        %v1047 = vunpack.c.l.b16 %v912
        %v1048 = vunpack.c.h.b16 %v912
        %v1049 = vunpack.c.l.b16 %v913
        %v1050 = vunpack.c.h.b16 %v913
        %v1051 = vunpack.c.l.b16 %v914
        %v1052 = vunpack.c.h.b16 %v914
        %v1053 = vunpack.c.l.b16 %v915
        %v1054 = vunpack.c.h.b16 %v915
        %v1055 = vunpack.c.l.b16 %v916
        %v1056 = vunpack.c.h.b16 %v916
        %v1057 = vunpack.c.l.b16 %v917
        %v1058 = vunpack.c.h.b16 %v917
        %v1059 = vunpack.c.l.b16 %v918
        %v1060 = vunpack.c.h.b16 %v918
        %v1061 = vunpack.c.l.b16 %v919
        %v1062 = vunpack.c.h.b16 %v919
        %v1063 = vunpack.c.l.b16 %v920
        %v1064 = vunpack.c.h.b16 %v920
        %v1065 = vunpack.c.l.b16 %v921
        %v1066 = vunpack.c.h.b16 %v921
        %v1067 = vunpack.c.l.b16 %v922
        %v1068 = vunpack.c.h.b16 %v922
        %v1069 = vunpack.c.l.b16 %v923
        %v1070 = vunpack.c.h.b16 %v923
        %v1071 = vunpack.c.l.b16 %v924
        %v1072 = vunpack.c.h.b16 %v924
        %v1073 = vunpack.c.l.b16 %v925
        %v1074 = vunpack.c.h.b16 %v925
        %v1075 = vunpack.c.l.b16 %v926
        %v1076 = vunpack.c.h.b16 %v926
        %v1077 = vunpack.c.l.b16 %v927
        %v1078 = vunpack.c.h.b16 %v927
        %v1079 = vunpack.c.l.b16 %v928
        %v1080 = vunpack.c.h.b16 %v928
        %v1081 = vunpack.c.l.b16 %v929
        %v1082 = vunpack.c.h.b16 %v929
        %v1083 = vunpack.c.l.b16 %v930
        %v1084 = vunpack.c.h.b16 %v930
        %v1085 = vunpack.c.l.b16 %v931
        %v1086 = vunpack.c.h.b16 %v931
        %v1087 = vunpack.c.l.b16 %v932
        %v1088 = vunpack.c.h.b16 %v932
        %v1089 = vpack.c.b16 %v995, %v993
        %v1090 = vpack.c.b16 %v996, %v994
        %v1091 = vpack.c.b16 %v999, %v997
        %v1092 = vpack.c.b16 %v1000, %v998
        %v1093 = vpack.c.b16 %v1003, %v1001
        %v1094 = vpack.c.b16 %v1004, %v1002
        %v1095 = vpack.c.b16 %v1007, %v1005
        %v1096 = vpack.c.b16 %v1008, %v1006
        %v1097 = vpack.c.b16 %v1011, %v1009
        %v1098 = vpack.c.b16 %v1012, %v1010
        %v1099 = vpack.c.b16 %v1015, %v1013
        %v1100 = vpack.c.b16 %v1016, %v1014
        %v1101 = vpack.c.b16 %v1019, %v1017
        %v1102 = vpack.c.b16 %v1020, %v1018
        %v1103 = vpack.c.b16 %v1023, %v1021
        %v1104 = vpack.c.b16 %v1024, %v1022
        %v1105 = vpack.c.b16 %v1027, %v1025
        %v1106 = vpack.c.b16 %v1028, %v1026
        %v1107 = vpack.c.b16 %v1031, %v1029
        %v1108 = vpack.c.b16 %v1032, %v1030
        %v1109 = vpack.c.b16 %v1035, %v1033
        %v1110 = vpack.c.b16 %v1036, %v1034
        %v1111 = vpack.c.b16 %v1039, %v1037
        %v1112 = vpack.c.b16 %v1040, %v1038
        %v1113 = vpack.c.b16 %v1043, %v1041
        %v1114 = vpack.c.b16 %v1044, %v1042
        %v1115 = vpack.c.b16 %v1047, %v1045
        %v1116 = vpack.c.b16 %v1048, %v1046
        %v1117 = vpack.c.b16 %v1051, %v1049
        %v1118 = vpack.c.b16 %v1052, %v1050
        %v1119 = vpack.c.b16 %v1055, %v1053
        %v1120 = vpack.c.b16 %v1056, %v1054
        %v1121 = vpack.c.b16 %v1059, %v1057
        %v1122 = vpack.c.b16 %v1060, %v1058
        %v1123 = vpack.c.b16 %v1063, %v1061
        %v1124 = vpack.c.b16 %v1064, %v1062
        %v1125 = vpack.c.b16 %v1067, %v1065
        %v1126 = vpack.c.b16 %v1068, %v1066
        %v1127 = vpack.c.b16 %v1071, %v1069
        %v1128 = vpack.c.b16 %v1072, %v1070
        %v1129 = vpack.c.b16 %v1075, %v1073
        %v1130 = vpack.c.b16 %v1076, %v1074
        %v1131 = vpack.c.b16 %v1079, %v1077
        %v1132 = vpack.c.b16 %v1080, %v1078
        %v1133 = vpack.c.b16 %v1083, %v1081
        %v1134 = vpack.c.b16 %v1084, %v1082
        %v1135 = vpack.c.b16 %v1087, %v1085
        %v1136 = vpack.c.b16 %v1088, %v1086
        %1185 = vmatprep.subr.bf16.mxu0 %v1090
        %1186 = vmatpush1.bf16.msra.mxu0 %v1089
        %1187 = vmatprep.subr.bf16.mxu0 %v1092
        %1188 = vmatpush1.bf16.msra.mxu0 %v1091
        %1189 = vmatprep.subr.bf16.mxu0 %v1094
        %1190 = vmatpush1.bf16.msra.mxu0 %v1093
        %1191 = vmatprep.subr.bf16.mxu0 %v1096
        %1192 = vmatpush1.bf16.msra.mxu0 %v1095
        %1193 = vmatprep.subr.bf16.mxu0 %v1098
        %1194 = vmatpush1.bf16.msra.mxu0 %v1097
        %1195 = vmatprep.subr.bf16.mxu0 %v1100
        %1196 = vmatpush1.bf16.msra.mxu0 %v1099
        %1197 = vmatprep.subr.bf16.mxu0 %v1102
        %1198 = vmatpush1.bf16.msra.mxu0 %v1101
        %1199 = vmatprep.subr.bf16.mxu0 %v1104
        %1200 = vmatpush1.bf16.msra.mxu0 %v1103
        %1201 = vmatprep.subr.bf16.mxu0 %v1106
        %1202 = vmatpush1.bf16.msra.mxu0 %v1105
        %1203 = vmatprep.subr.bf16.mxu0 %v1108
        %1204 = vmatpush1.bf16.msra.mxu0 %v1107
        %1205 = vmatprep.subr.bf16.mxu0 %v1110
        %1206 = vmatpush1.bf16.msra.mxu0 %v1109
        %1207 = vmatprep.subr.bf16.mxu0 %v1112
        %1208 = vmatpush1.bf16.msra.mxu0 %v1111
        %1209 = vmatprep.subr.bf16.mxu0 %v1114
        %1210 = vmatpush1.bf16.msra.mxu0 %v1113
        %1211 = vmatprep.subr.bf16.mxu0 %v1116
        %1212 = vmatpush1.bf16.msra.mxu0 %v1115
        %1213 = vmatprep.subr.bf16.mxu0 %v1118
        %1214 = vmatpush1.bf16.msra.mxu0 %v1117
        %1215 = vmatprep.subr.bf16.mxu0 %v1120
        %1216 = vmatpush1.bf16.msra.mxu0 %v1119
        %1217 = vmatprep.mubr.bf16.mxu0 %v883
        %1218 = vmatmul.mubr.bf16.gmra.mrb[0].mxu0 %v882
        %v1219 = vpop.f32.mrb[0].mxu0
        %v1220 = vadd.f32 %v938, %v1219
        %v1221 = vpop.f32.mrb[0].mxu0
        %v1222 = vadd.f32 %v942, %v1221
        %v1223 = vpop.f32.mrb[0].mxu0
        %v1224 = vpop.f32.mrb[0].mxu0
        %1225 = vdwg.mxu0
        %1226 = vmatprep.subr.bf16.mxu0 %v1122
        %1227 = vmatpush1.bf16.msra.mxu0 %v1121
        %1228 = vmatprep.subr.bf16.mxu0 %v1124
        %1229 = vmatpush1.bf16.msra.mxu0 %v1123
        %1230 = vmatprep.subr.bf16.mxu0 %v1126
        %1231 = vmatpush1.bf16.msra.mxu0 %v1125
        %1232 = vmatprep.subr.bf16.mxu0 %v1128
        %1233 = vmatpush1.bf16.msra.mxu0 %v1127
        %1234 = vmatprep.subr.bf16.mxu0 %v1130
        %1235 = vmatpush1.bf16.msra.mxu0 %v1129
        %1236 = vmatprep.subr.bf16.mxu0 %v1132
        %1237 = vmatpush1.bf16.msra.mxu0 %v1131
        %1238 = vmatprep.subr.bf16.mxu0 %v1134
        %1239 = vmatpush1.bf16.msra.mxu0 %v1133
        %1240 = vmatprep.subr.bf16.mxu0 %v1136
        %1241 = vmatpush1.bf16.msra.mxu0 %v1135
        %1242 = vmatprep.subr.bf16.mxu0 0
        %1243 = vmatpush1.bf16.msra.mxu0 0
        %1244 = vmatprep.subr.bf16.mxu0 0
        %1245 = vmatpush1.bf16.msra.mxu0 0
        %1246 = vmatprep.subr.bf16.mxu0 0
        %1247 = vmatpush1.bf16.msra.mxu0 0
        %1248 = vmatprep.subr.bf16.mxu0 0
        %1249 = vmatpush1.bf16.msra.mxu0 0
        %1250 = vmatprep.subr.bf16.mxu0 0
        %1251 = vmatpush1.bf16.msra.mxu0 0
        %1252 = vmatprep.subr.bf16.mxu0 0
        %1253 = vmatpush1.bf16.msra.mxu0 0
        %1254 = vmatprep.subr.bf16.mxu0 0
        %1255 = vmatpush1.bf16.msra.mxu0 0
        %1256 = vmatprep.subr.bf16.mxu0 0
        %1257 = vmatpush1.bf16.msra.mxu0 0
        %1258 = vmatprep.mubr.bf16.mxu0 0
        %1259 = vmatmul.mubr.bf16.gmra.mrb[0].mxu0 %v884
        %v1260 = vpop.f32.mrb[0].mxu0
        %v1261 = vadd.f32 %v1220, %v1260
        %v1262 = vpop.f32.mrb[0].mxu0
        %v1263 = vadd.f32 %v1222, %v1262
        %v1264 = vpop.f32.mrb[0].mxu0
        %v1265 = vpop.f32.mrb[0].mxu0
        %1266 = vdwg.mxu0
        %v1267 = vmax.f32 %v1261, 0.0
        %v1268 = vmax.f32 %v1263, 0.0
        %v1269 = vpack.c.bf16 %v1267, %v1267
        %v1270 = vpack.c.bf16 %v1268, %v1268
        %v1271 = vld [vmem:[#allocation6] sm:$0xf]
        %v1272 = vld [vmem:[#allocation6 + $0x4] sm:$0xf]
        %v1273 = vld [vmem:[#allocation6 + $0x8] sm:$0xf]
        %v1274 = vld [vmem:[#allocation6 + $0xc] sm:$0xf]
        %v1275 = vld [vmem:[#allocation6 + $0x10] sm:$0xf]
        %v1276 = vld [vmem:[#allocation6 + $0x14] sm:$0xf]
        %v1277 = vld [vmem:[#allocation6 + $0x18] sm:$0xf]
        %v1278 = vld [vmem:[#allocation6 + $0x1c] sm:$0xf]
        %v1279 = vld [vmem:[#allocation6 + $0x20] sm:$0xf]
        %v1280 = vld [vmem:[#allocation6 + $0x24] sm:$0xf]
        %v1281 = vld [vmem:[#allocation6 + $0x28] sm:$0xf]
        %v1282 = vld [vmem:[#allocation6 + $0x2c] sm:$0xf]
        %v1283 = vld [vmem:[#allocation6 + $0x30] sm:$0xf]
        %v1284 = vld [vmem:[#allocation6 + $0x34] sm:$0xf]
        %v1285 = vld [vmem:[#allocation6 + $0x38] sm:$0xf]
        %v1286 = vld [vmem:[#allocation6 + $0x3c] sm:$0xf]
        %v1287 = vld [vmem:[#allocation6 + $0x40] sm:$0xf]
        %v1288 = vld [vmem:[#allocation6 + $0x44] sm:$0xf]
        %v1289 = vld [vmem:[#allocation6 + $0x48] sm:$0xf]
        %v1290 = vld [vmem:[#allocation6 + $0x4c] sm:$0xf]
        %v1291 = vld [vmem:[#allocation6 + $0x50] sm:$0xf]
        %v1292 = vld [vmem:[#allocation6 + $0x54] sm:$0xf]
        %v1293 = vld [vmem:[#allocation6 + $0x58] sm:$0xf]
        %v1294 = vld [vmem:[#allocation6 + $0x5c] sm:$0xf]
        %v1295 = vld [vmem:[#allocation6 + $0x60] sm:$0xf]
        %v1296 = vld [vmem:[#allocation6 + $0x64] sm:$0xf]
        %v1297 = vld [vmem:[#allocation6 + $0x68] sm:$0xf]
        %v1298 = vld [vmem:[#allocation6 + $0x6c] sm:$0xf]
        %v1299 = vld [vmem:[#allocation6 + $0x70] sm:$0xf]
        %v1300 = vld [vmem:[#allocation6 + $0x74] sm:$0xf]
        %v1301 = vld [vmem:[#allocation6 + $0x78] sm:$0xf]
        %v1302 = vld [vmem:[#allocation6 + $0x7c] sm:$0xf]
        %v1303 = vld [vmem:[%s12] sm:$0x1]
        %v1305 = vlaneseq
        %v1306 = vshrl.u32 %v1305, 7
        %v1307 = vsub.s32 0, %v1306
        %v1308 = vrot.slane %v1303, %v1307
        %v1342 = vunpack.c.l.b16 %v1271
        %v1343 = vunpack.c.l.b16 %v1272
        %v1344 = vunpack.c.l.b16 %v1273
        %v1345 = vunpack.c.l.b16 %v1274
        %v1346 = vunpack.c.l.b16 %v1275
        %v1347 = vunpack.c.l.b16 %v1276
        %v1348 = vunpack.c.l.b16 %v1277
        %v1349 = vunpack.c.l.b16 %v1278
        %v1350 = vunpack.c.l.b16 %v1279
        %v1351 = vunpack.c.l.b16 %v1280
        %v1352 = vunpack.c.l.b16 %v1281
        %v1353 = vunpack.c.l.b16 %v1282
        %v1354 = vunpack.c.l.b16 %v1283
        %v1355 = vunpack.c.l.b16 %v1284
        %v1356 = vunpack.c.l.b16 %v1285
        %v1357 = vunpack.c.l.b16 %v1286
        %v1358 = vunpack.c.l.b16 %v1287
        %v1359 = vunpack.c.l.b16 %v1288
        %v1360 = vunpack.c.l.b16 %v1289
        %v1361 = vunpack.c.l.b16 %v1290
        %v1362 = vunpack.c.l.b16 %v1291
        %v1363 = vunpack.c.l.b16 %v1292
        %v1364 = vunpack.c.l.b16 %v1293
        %v1365 = vunpack.c.l.b16 %v1294
        %v1366 = vunpack.c.l.b16 %v1295
        %v1367 = vunpack.c.l.b16 %v1296
        %v1368 = vunpack.c.l.b16 %v1297
        %v1369 = vunpack.c.l.b16 %v1298
        %v1370 = vunpack.c.l.b16 %v1299
        %v1371 = vunpack.c.l.b16 %v1300
        %v1372 = vunpack.c.l.b16 %v1301
        %v1373 = vunpack.c.l.b16 %v1302
        %v1374 = vpack.c.b16 %v1343, %v1342
        %v1375 = vpack.c.b16 %v1345, %v1344
        %v1376 = vpack.c.b16 %v1347, %v1346
        %v1377 = vpack.c.b16 %v1349, %v1348
        %v1378 = vpack.c.b16 %v1351, %v1350
        %v1379 = vpack.c.b16 %v1353, %v1352
        %v1380 = vpack.c.b16 %v1355, %v1354
        %v1381 = vpack.c.b16 %v1357, %v1356
        %v1382 = vpack.c.b16 %v1359, %v1358
        %v1383 = vpack.c.b16 %v1361, %v1360
        %v1384 = vpack.c.b16 %v1363, %v1362
        %v1385 = vpack.c.b16 %v1365, %v1364
        %v1386 = vpack.c.b16 %v1367, %v1366
        %v1387 = vpack.c.b16 %v1369, %v1368
        %v1388 = vpack.c.b16 %v1371, %v1370
        %v1389 = vpack.c.b16 %v1373, %v1372
        %1406 = vmatprep.subr.bf16.mxu0 0
        %1407 = vmatpush1.bf16.msra.mxu0 %v1374
        %1408 = vmatprep.subr.bf16.mxu0 0
        %1409 = vmatpush1.bf16.msra.mxu0 %v1375
        %1410 = vmatprep.subr.bf16.mxu0 0
        %1411 = vmatpush1.bf16.msra.mxu0 %v1376
        %1412 = vmatprep.subr.bf16.mxu0 0
        %1413 = vmatpush1.bf16.msra.mxu0 %v1377
        %1414 = vmatprep.subr.bf16.mxu0 0
        %1415 = vmatpush1.bf16.msra.mxu0 %v1378
        %1416 = vmatprep.subr.bf16.mxu0 0
        %1417 = vmatpush1.bf16.msra.mxu0 %v1379
        %1418 = vmatprep.subr.bf16.mxu0 0
        %1419 = vmatpush1.bf16.msra.mxu0 %v1380
        %1420 = vmatprep.subr.bf16.mxu0 0
        %1421 = vmatpush1.bf16.msra.mxu0 %v1381
        %1422 = vmatprep.subr.bf16.mxu0 0
        %1423 = vmatpush1.bf16.msra.mxu0 %v1382
        %1424 = vmatprep.subr.bf16.mxu0 0
        %1425 = vmatpush1.bf16.msra.mxu0 %v1383
        %1426 = vmatprep.subr.bf16.mxu0 0
        %1427 = vmatpush1.bf16.msra.mxu0 %v1384
        %1428 = vmatprep.subr.bf16.mxu0 0
        %1429 = vmatpush1.bf16.msra.mxu0 %v1385
        %1430 = vmatprep.subr.bf16.mxu0 0
        %1431 = vmatpush1.bf16.msra.mxu0 %v1386
        %1432 = vmatprep.subr.bf16.mxu0 0
        %1433 = vmatpush1.bf16.msra.mxu0 %v1387
        %1434 = vmatprep.subr.bf16.mxu0 0
        %1435 = vmatpush1.bf16.msra.mxu0 %v1388
        %1436 = vmatprep.subr.bf16.mxu0 0
        %1437 = vmatpush1.bf16.msra.mxu0 %v1389
        %1438 = vmatprep.mubr.bf16.mxu0 %v1270
        %1439 = vmatmul.mubr.bf16.gmra.mrb[0].mxu0 %v1269
        %v1440 = vpop.f32.mrb[0].mxu0
        %v1441 = vadd.f32 %v1308, %v1440
        %v1442 = vpop.f32.mrb[0].mxu0
        %v1443 = vpop.f32.mrb[0].mxu0
        %v1444 = vpop.f32.mrb[0].mxu0
        %1445 = vdwg.mxu0
        %v1446 = vmax.f32 %v1441, 0.0
        %v1447 = vpack.c.bf16 %v1446, %v1446
        %v1448 = vld [vmem:[#allocation7] sm:$0xf]
        %v1449 = vld [vmem:[#allocation7 + $0x4] sm:$0xf]
        %v1450 = vld [vmem:[#allocation7 + $0x8] sm:$0xf]
        %v1451 = vld [vmem:[#allocation7 + $0xc] sm:$0xf]
        %v1452 = vld [vmem:[#allocation7 + $0x10] sm:$0xf]
        %v1453 = vld [vmem:[#allocation7 + $0x14] sm:$0xf]
        %v1454 = vld [vmem:[#allocation7 + $0x18] sm:$0xf]
        %v1455 = vld [vmem:[#allocation7 + $0x1c] sm:$0xf]
        %v1456 = vld [vmem:[#allocation7 + $0x20] sm:$0xf]
        %v1457 = vld [vmem:[#allocation7 + $0x24] sm:$0xf]
        %v1458 = vld [vmem:[#allocation7 + $0x28] sm:$0xf]
        %v1459 = vld [vmem:[#allocation7 + $0x2c] sm:$0xf]
        %v1460 = vld [vmem:[#allocation7 + $0x30] sm:$0xf]
        %v1461 = vld [vmem:[#allocation7 + $0x34] sm:$0xf]
        %v1462 = vld [vmem:[#allocation7 + $0x38] sm:$0xf]
        %v1463 = vld [vmem:[#allocation7 + $0x3c] sm:$0xf]
        %v1464 = vld [vmem:[%s13] sm:$0x1]
        %v1466 = vlaneseq
        %v1467 = vshrl.u32 %v1466, 7
        %v1468 = vsub.s32 0, %v1467
        %v1469 = vrot.slane %v1464, %v1468
        %v1487 = vunpack.c.l.b16 %v1448
        %v1488 = vunpack.c.l.b16 %v1449
        %v1489 = vunpack.c.l.b16 %v1450
        %v1490 = vunpack.c.l.b16 %v1451
        %v1491 = vunpack.c.l.b16 %v1452
        %v1492 = vunpack.c.l.b16 %v1453
        %v1493 = vunpack.c.l.b16 %v1454
        %v1494 = vunpack.c.l.b16 %v1455
        %v1495 = vunpack.c.l.b16 %v1456
        %v1496 = vunpack.c.l.b16 %v1457
        %v1497 = vunpack.c.l.b16 %v1458
        %v1498 = vunpack.c.l.b16 %v1459
        %v1499 = vunpack.c.l.b16 %v1460
        %v1500 = vunpack.c.l.b16 %v1461
        %v1501 = vunpack.c.l.b16 %v1462
        %v1502 = vunpack.c.l.b16 %v1463
        %v1503 = vpack.c.b16 %v1488, %v1487
        %v1504 = vpack.c.b16 %v1490, %v1489
        %v1505 = vpack.c.b16 %v1492, %v1491
        %v1506 = vpack.c.b16 %v1494, %v1493
        %v1507 = vpack.c.b16 %v1496, %v1495
        %v1508 = vpack.c.b16 %v1498, %v1497
        %v1509 = vpack.c.b16 %v1500, %v1499
        %v1510 = vpack.c.b16 %v1502, %v1501
        %1519 = vmatprep.subr.bf16.mxu0 0
        %1520 = vmatpush1.bf16.msra.mxu0 %v1503
        %1521 = vmatprep.subr.bf16.mxu0 0
        %1522 = vmatpush1.bf16.msra.mxu0 %v1504
        %1523 = vmatprep.subr.bf16.mxu0 0
        %1524 = vmatpush1.bf16.msra.mxu0 %v1505
        %1525 = vmatprep.subr.bf16.mxu0 0
        %1526 = vmatpush1.bf16.msra.mxu0 %v1506
        %1527 = vmatprep.subr.bf16.mxu0 0
        %1528 = vmatpush1.bf16.msra.mxu0 %v1507
        %1529 = vmatprep.subr.bf16.mxu0 0
        %1530 = vmatpush1.bf16.msra.mxu0 %v1508
        %1531 = vmatprep.subr.bf16.mxu0 0
        %1532 = vmatpush1.bf16.msra.mxu0 %v1509
        %1533 = vmatprep.subr.bf16.mxu0 0
        %1534 = vmatpush1.bf16.msra.mxu0 %v1510
        %1535 = vmatprep.subr.bf16.mxu0 0
        %1536 = vmatpush1.bf16.msra.mxu0 0
        %1537 = vmatprep.subr.bf16.mxu0 0
        %1538 = vmatpush1.bf16.msra.mxu0 0
        %1539 = vmatprep.subr.bf16.mxu0 0
        %1540 = vmatpush1.bf16.msra.mxu0 0
        %1541 = vmatprep.subr.bf16.mxu0 0
        %1542 = vmatpush1.bf16.msra.mxu0 0
        %1543 = vmatprep.subr.bf16.mxu0 0
        %1544 = vmatpush1.bf16.msra.mxu0 0
        %1545 = vmatprep.subr.bf16.mxu0 0
        %1546 = vmatpush1.bf16.msra.mxu0 0
        %1547 = vmatprep.subr.bf16.mxu0 0
        %1548 = vmatpush1.bf16.msra.mxu0 0
        %1549 = vmatprep.subr.bf16.mxu0 0
        %1550 = vmatpush1.bf16.msra.mxu0 0
        %1551 = vmatprep.mubr.bf16.mxu0 0
        %1552 = vmatmul.mubr.bf16.gmra.mrb[0].mxu0 %v1447
        %v1553 = vpop.f32.mrb[0].mxu0
        %v1554 = vadd.f32 %v1469, %v1553
        %v1555 = vpop.f32.mrb[0].mxu0
        %v1556 = vpop.f32.mrb[0].mxu0
        %v1557 = vpop.f32.mrb[0].mxu0
        %1558 = vdwg.mxu0
        %v1559 = vmax.f32 %v1554, 0.0
        %v1560 = vpack.c.bf16 %v1559, %v1559
        %v1561 = vld [vmem:[%s5] sm:$0xf]
        %v1562 = vld [vmem:[%s5 + $0x4] sm:$0xf]
        %v1563 = vld [vmem:[%s5 + $0x8] sm:$0xf]
        %v1564 = vld [vmem:[%s5 + $0xc] sm:$0xf]
        %v1565 = vld [vmem:[%s5 + $0x10] sm:$0xf]
        %v1566 = vld [vmem:[%s5 + $0x14] sm:$0xf]
        %v1567 = vld [vmem:[%s5 + $0x18] sm:$0xf]
        %v1568 = vld [vmem:[%s5 + $0x1c] sm:$0xf]
        %v1569 = vld [vmem:[%s5 + $0x20] sm:$0xf]
        %v1570 = vld [vmem:[%s5 + $0x24] sm:$0xf]
        %v1571 = vld [vmem:[%s5 + $0x28] sm:$0xf]
        %v1572 = vld [vmem:[%s5 + $0x2c] sm:$0xf]
        %v1573 = vld [vmem:[%s5 + $0x30] sm:$0xf]
        %v1574 = vld [vmem:[%s5 + $0x34] sm:$0xf]
        %v1575 = vld [vmem:[%s5 + $0x38] sm:$0xf]
        %v1576 = vld [vmem:[%s5 + $0x3c] sm:$0xf]
        %v1577 = vld [vmem:[%s14] sm:$0x1]
        %v1579 = vlaneseq
        %v1580 = vshrl.u32 %v1579, 7
        %v1581 = vsub.s32 0, %v1580
        %v1582 = vrot.slane %v1577, %v1581
        %v1600 = vunpack.c.l.b16 %v1561
        %v1601 = vunpack.c.l.b16 %v1562
        %v1602 = vunpack.c.l.b16 %v1563
        %v1603 = vunpack.c.l.b16 %v1564
        %v1604 = vunpack.c.l.b16 %v1565
        %v1605 = vunpack.c.l.b16 %v1566
        %v1606 = vunpack.c.l.b16 %v1567
        %v1607 = vunpack.c.l.b16 %v1568
        %v1608 = vunpack.c.l.b16 %v1569
        %v1609 = vunpack.c.l.b16 %v1570
        %v1610 = vunpack.c.l.b16 %v1571
        %v1611 = vunpack.c.l.b16 %v1572
        %v1612 = vunpack.c.l.b16 %v1573
        %v1613 = vunpack.c.l.b16 %v1574
        %v1614 = vunpack.c.l.b16 %v1575
        %v1615 = vunpack.c.l.b16 %v1576
        %v1616 = vpack.c.b16 %v1601, %v1600
        %v1617 = vpack.c.b16 %v1603, %v1602
        %v1618 = vpack.c.b16 %v1605, %v1604
        %v1619 = vpack.c.b16 %v1607, %v1606
        %v1620 = vpack.c.b16 %v1609, %v1608
        %v1621 = vpack.c.b16 %v1611, %v1610
        %v1622 = vpack.c.b16 %v1613, %v1612
        %v1623 = vpack.c.b16 %v1615, %v1614
        %1632 = vmatprep.subr.bf16.mxu0 0
        %1633 = vmatpush1.bf16.msra.mxu0 %v1616
        %1634 = vmatprep.subr.bf16.mxu0 0
        %1635 = vmatpush1.bf16.msra.mxu0 %v1617
        %1636 = vmatprep.subr.bf16.mxu0 0
        %1637 = vmatpush1.bf16.msra.mxu0 %v1618
        %1638 = vmatprep.subr.bf16.mxu0 0
        %1639 = vmatpush1.bf16.msra.mxu0 %v1619
        %1640 = vmatprep.subr.bf16.mxu0 0
        %1641 = vmatpush1.bf16.msra.mxu0 %v1620
        %1642 = vmatprep.subr.bf16.mxu0 0
        %1643 = vmatpush1.bf16.msra.mxu0 %v1621
        %1644 = vmatprep.subr.bf16.mxu0 0
        %1645 = vmatpush1.bf16.msra.mxu0 %v1622
        %1646 = vmatprep.subr.bf16.mxu0 0
        %1647 = vmatpush1.bf16.msra.mxu0 %v1623
        %1648 = vmatprep.subr.bf16.mxu0 0
        %1649 = vmatpush1.bf16.msra.mxu0 0
        %1650 = vmatprep.subr.bf16.mxu0 0
        %1651 = vmatpush1.bf16.msra.mxu0 0
        %1652 = vmatprep.subr.bf16.mxu0 0
        %1653 = vmatpush1.bf16.msra.mxu0 0
        %1654 = vmatprep.subr.bf16.mxu0 0
        %1655 = vmatpush1.bf16.msra.mxu0 0
        %1656 = vmatprep.subr.bf16.mxu0 0
        %1657 = vmatpush1.bf16.msra.mxu0 0
        %1658 = vmatprep.subr.bf16.mxu0 0
        %1659 = vmatpush1.bf16.msra.mxu0 0
        %1660 = vmatprep.subr.bf16.mxu0 0
        %1661 = vmatpush1.bf16.msra.mxu0 0
        %1662 = vmatprep.subr.bf16.mxu0 0
        %1663 = vmatpush1.bf16.msra.mxu0 0
        %1664 = vmatprep.mubr.bf16.mxu0 0
        %1665 = vmatmul.mubr.bf16.gmra.mrb[0].mxu0 %v1560
        %v1666 = vpop.f32.mrb[0].mxu0
        %v1667 = vadd.f32 %v1582, %v1666
        %v1668 = vpop.f32.mrb[0].mxu0
        %v1669 = vpop.f32.mrb[0].mxu0
        %v1670 = vpop.f32.mrb[0].mxu0
        %1671 = vdwg.mxu0
        %v1672 = vmax.f32 %v1667, 0.0
        %v1673 = vpack.c.bf16 %v1672, %v1672
        %v1674 = vld [vmem:[#allocation9] sm:$0xf]
        %v1675 = vld [vmem:[#allocation9 + $0x4] sm:$0xf]
        %v1676 = vld [vmem:[#allocation9 + $0x8] sm:$0xf]
        %v1677 = vld [vmem:[#allocation9 + $0xc] sm:$0xf]
        %v1678 = vld [vmem:[#allocation9 + $0x10] sm:$0xf]
        %v1679 = vld [vmem:[#allocation9 + $0x14] sm:$0xf]
        %v1680 = vld [vmem:[#allocation9 + $0x18] sm:$0xf]
        %v1681 = vld [vmem:[#allocation9 + $0x1c] sm:$0xf]
        %v1682 = vld [vmem:[#allocation9 + $0x20] sm:$0xf]
        %v1683 = vld [vmem:[#allocation9 + $0x24] sm:$0xf]
        %v1684 = vld [vmem:[#allocation9 + $0x28] sm:$0xf]
        %v1685 = vld [vmem:[#allocation9 + $0x2c] sm:$0xf]
        %v1686 = vld [vmem:[#allocation9 + $0x30] sm:$0xf]
        %v1687 = vld [vmem:[#allocation9 + $0x34] sm:$0xf]
        %v1688 = vld [vmem:[#allocation9 + $0x38] sm:$0xf]
        %v1689 = vld [vmem:[#allocation9 + $0x3c] sm:$0xf]
        %v1690 = vld [vmem:[%s15] sm:$0x1]
        %v1692 = vlaneseq
        %v1693 = vshrl.u32 %v1692, 7
        %v1694 = vsub.s32 0, %v1693
        %v1695 = vrot.slane %v1690, %v1694
        %v1713 = vunpack.c.l.b16 %v1674
        %v1714 = vunpack.c.l.b16 %v1675
        %v1715 = vunpack.c.l.b16 %v1676
        %v1716 = vunpack.c.l.b16 %v1677
        %v1717 = vunpack.c.l.b16 %v1678
        %v1718 = vunpack.c.l.b16 %v1679
        %v1719 = vunpack.c.l.b16 %v1680
        %v1720 = vunpack.c.l.b16 %v1681
        %v1721 = vunpack.c.l.b16 %v1682
        %v1722 = vunpack.c.l.b16 %v1683
        %v1723 = vunpack.c.l.b16 %v1684
        %v1724 = vunpack.c.l.b16 %v1685
        %v1725 = vunpack.c.l.b16 %v1686
        %v1726 = vunpack.c.l.b16 %v1687
        %v1727 = vunpack.c.l.b16 %v1688
        %v1728 = vunpack.c.l.b16 %v1689
        %v1729 = vpack.c.b16 %v1714, %v1713
        %v1730 = vpack.c.b16 %v1716, %v1715
        %v1731 = vpack.c.b16 %v1718, %v1717
        %v1732 = vpack.c.b16 %v1720, %v1719
        %v1733 = vpack.c.b16 %v1722, %v1721
        %v1734 = vpack.c.b16 %v1724, %v1723
        %v1735 = vpack.c.b16 %v1726, %v1725
        %v1736 = vpack.c.b16 %v1728, %v1727
        %1745 = vmatprep.subr.bf16.mxu0 0
        %1746 = vmatpush1.bf16.msra.mxu0 %v1729
        %1747 = vmatprep.subr.bf16.mxu0 0
        %1748 = vmatpush1.bf16.msra.mxu0 %v1730
        %1749 = vmatprep.subr.bf16.mxu0 0
        %1750 = vmatpush1.bf16.msra.mxu0 %v1731
        %1751 = vmatprep.subr.bf16.mxu0 0
        %1752 = vmatpush1.bf16.msra.mxu0 %v1732
        %1753 = vmatprep.subr.bf16.mxu0 0
        %1754 = vmatpush1.bf16.msra.mxu0 %v1733
        %1755 = vmatprep.subr.bf16.mxu0 0
        %1756 = vmatpush1.bf16.msra.mxu0 %v1734
        %1757 = vmatprep.subr.bf16.mxu0 0
        %1758 = vmatpush1.bf16.msra.mxu0 %v1735
        %1759 = vmatprep.subr.bf16.mxu0 0
        %1760 = vmatpush1.bf16.msra.mxu0 %v1736
        %1761 = vmatprep.subr.bf16.mxu0 0
        %1762 = vmatpush1.bf16.msra.mxu0 0
        %1763 = vmatprep.subr.bf16.mxu0 0
        %1764 = vmatpush1.bf16.msra.mxu0 0
        %1765 = vmatprep.subr.bf16.mxu0 0
        %1766 = vmatpush1.bf16.msra.mxu0 0
        %1767 = vmatprep.subr.bf16.mxu0 0
        %1768 = vmatpush1.bf16.msra.mxu0 0
        %1769 = vmatprep.subr.bf16.mxu0 0
        %1770 = vmatpush1.bf16.msra.mxu0 0
        %1771 = vmatprep.subr.bf16.mxu0 0
        %1772 = vmatpush1.bf16.msra.mxu0 0
        %1773 = vmatprep.subr.bf16.mxu0 0
        %1774 = vmatpush1.bf16.msra.mxu0 0
        %1775 = vmatprep.subr.bf16.mxu0 0
        %1776 = vmatpush1.bf16.msra.mxu0 0
        %1777 = vmatprep.mubr.bf16.mxu0 0
        %1778 = vmatmul.mubr.bf16.gmra.mrb[0].mxu0 %v1673
        %v1779 = vpop.f32.mrb[0].mxu0
        %v1780 = vadd.f32 %v1695, %v1779
        %v1781 = vpop.f32.mrb[0].mxu0
        %v1782 = vpop.f32.mrb[0].mxu0
        %v1783 = vpop.f32.mrb[0].mxu0
        %1784 = vdwg.mxu0
        %v1785 = vmax.f32 %v1780, 0.0
        %v1786 = vpack.c.bf16 %v1785, %v1785
        %v1787 = vld [vmem:[#allocation10] sm:$0xf]
        %v1788 = vld [vmem:[#allocation10 + $0x4] sm:$0xf]
        %v1789 = vld [vmem:[#allocation10 + $0x8] sm:$0xf]
        %v1790 = vld [vmem:[#allocation10 + $0xc] sm:$0xf]
        %v1791 = vld [vmem:[#allocation10 + $0x10] sm:$0xf]
        %v1792 = vld [vmem:[#allocation10 + $0x14] sm:$0xf]
        %v1793 = vld [vmem:[#allocation10 + $0x18] sm:$0xf]
        %v1794 = vld [vmem:[#allocation10 + $0x1c] sm:$0xf]
        %v1795 = vld [vmem:[#allocation10 + $0x20] sm:$0xf]
        %v1796 = vld [vmem:[#allocation10 + $0x24] sm:$0xf]
        %v1797 = vld [vmem:[#allocation10 + $0x28] sm:$0xf]
        %v1798 = vld [vmem:[#allocation10 + $0x2c] sm:$0xf]
        %v1799 = vld [vmem:[#allocation10 + $0x30] sm:$0xf]
        %v1800 = vld [vmem:[#allocation10 + $0x34] sm:$0xf]
        %v1801 = vld [vmem:[#allocation10 + $0x38] sm:$0xf]
        %v1802 = vld [vmem:[#allocation10 + $0x3c] sm:$0xf]
        %v1803 = vld [vmem:[%s16] sm:$0x1]
        %v1805 = vlaneseq
        %v1806 = vshrl.u32 %v1805, 7
        %v1807 = vsub.s32 0, %v1806
        %v1808 = vrot.slane %v1803, %v1807
        %v1826 = vunpack.c.l.b16 %v1787
        %v1827 = vunpack.c.l.b16 %v1788
        %v1828 = vunpack.c.l.b16 %v1789
        %v1829 = vunpack.c.l.b16 %v1790
        %v1830 = vunpack.c.l.b16 %v1791
        %v1831 = vunpack.c.l.b16 %v1792
        %v1832 = vunpack.c.l.b16 %v1793
        %v1833 = vunpack.c.l.b16 %v1794
        %v1834 = vunpack.c.l.b16 %v1795
        %v1835 = vunpack.c.l.b16 %v1796
        %v1836 = vunpack.c.l.b16 %v1797
        %v1837 = vunpack.c.l.b16 %v1798
        %v1838 = vunpack.c.l.b16 %v1799
        %v1839 = vunpack.c.l.b16 %v1800
        %v1840 = vunpack.c.l.b16 %v1801
        %v1841 = vunpack.c.l.b16 %v1802
        %v1842 = vpack.c.b16 %v1827, %v1826
        %v1843 = vpack.c.b16 %v1829, %v1828
        %v1844 = vpack.c.b16 %v1831, %v1830
        %v1845 = vpack.c.b16 %v1833, %v1832
        %v1846 = vpack.c.b16 %v1835, %v1834
        %v1847 = vpack.c.b16 %v1837, %v1836
        %v1848 = vpack.c.b16 %v1839, %v1838
        %v1849 = vpack.c.b16 %v1841, %v1840
        %1858 = vmatprep.subr.bf16.mxu0 0
        %1859 = vmatpush1.bf16.msra.mxu0 %v1842
        %1860 = vmatprep.subr.bf16.mxu0 0
        %1861 = vmatpush1.bf16.msra.mxu0 %v1843
        %1862 = vmatprep.subr.bf16.mxu0 0
        %1863 = vmatpush1.bf16.msra.mxu0 %v1844
        %1864 = vmatprep.subr.bf16.mxu0 0
        %1865 = vmatpush1.bf16.msra.mxu0 %v1845
        %1866 = vmatprep.subr.bf16.mxu0 0
        %1867 = vmatpush1.bf16.msra.mxu0 %v1846
        %1868 = vmatprep.subr.bf16.mxu0 0
        %1869 = vmatpush1.bf16.msra.mxu0 %v1847
        %1870 = vmatprep.subr.bf16.mxu0 0
        %1871 = vmatpush1.bf16.msra.mxu0 %v1848
        %1872 = vmatprep.subr.bf16.mxu0 0
        %1873 = vmatpush1.bf16.msra.mxu0 %v1849
        %1874 = vmatprep.subr.bf16.mxu0 0
        %1875 = vmatpush1.bf16.msra.mxu0 0
        %1876 = vmatprep.subr.bf16.mxu0 0
        %1877 = vmatpush1.bf16.msra.mxu0 0
        %1878 = vmatprep.subr.bf16.mxu0 0
        %1879 = vmatpush1.bf16.msra.mxu0 0
        %1880 = vmatprep.subr.bf16.mxu0 0
        %1881 = vmatpush1.bf16.msra.mxu0 0
        %1882 = vmatprep.subr.bf16.mxu0 0
        %1883 = vmatpush1.bf16.msra.mxu0 0
        %1884 = vmatprep.subr.bf16.mxu0 0
        %1885 = vmatpush1.bf16.msra.mxu0 0
        %1886 = vmatprep.subr.bf16.mxu0 0
        %1887 = vmatpush1.bf16.msra.mxu0 0
        %1888 = vmatprep.subr.bf16.mxu0 0
        %1889 = vmatpush1.bf16.msra.mxu0 0
        %1890 = vmatprep.mubr.bf16.mxu0 0
        %1891 = vmatmul.mubr.bf16.gmra.mrb[0].mxu0 %v1786
        %v1892 = vpop.f32.mrb[0].mxu0
        %v1893 = vadd.f32 %v1808, %v1892
        %v1894 = vpop.f32.mrb[0].mxu0
        %v1895 = vpop.f32.mrb[0].mxu0
        %v1896 = vpop.f32.mrb[0].mxu0
        %1897 = vdwg.mxu0
        %v1898 = vmax.f32 %v1893, 0.0
        %v1899 = vpack.c.bf16 %v1898, %v1898
        %v1900 = vld [vmem:[#allocation12] sm:$0xf]
        %v1901 = vld [vmem:[#allocation12 + $0x4] sm:$0xf]
        %v1902 = vld [vmem:[#allocation12 + $0x8] sm:$0xf]
        %v1903 = vld [vmem:[#allocation12 + $0xc] sm:$0xf]
        %v1904 = vld [vmem:[#allocation12 + $0x10] sm:$0xf]
        %v1905 = vld [vmem:[#allocation12 + $0x14] sm:$0xf]
        %v1906 = vld [vmem:[#allocation12 + $0x18] sm:$0xf]
        %v1907 = vld [vmem:[#allocation12 + $0x1c] sm:$0xf]
        %v1908 = vld [vmem:[#allocation12 + $0x20] sm:$0xf]
        %v1909 = vld [vmem:[#allocation12 + $0x24] sm:$0xf]
        %v1910 = vld [vmem:[#allocation12 + $0x28] sm:$0xf]
        %v1911 = vld [vmem:[#allocation12 + $0x2c] sm:$0xf]
        %v1912 = vld [vmem:[#allocation12 + $0x30] sm:$0xf]
        %v1913 = vld [vmem:[#allocation12 + $0x34] sm:$0xf]
        %v1914 = vld [vmem:[#allocation12 + $0x38] sm:$0xf]
        %v1915 = vld [vmem:[#allocation12 + $0x3c] sm:$0xf]
        %v1916 = vld [vmem:[%s17] sm:$0x1]
        %v1918 = vlaneseq
        %v1919 = vshrl.u32 %v1918, 7
        %v1920 = vsub.s32 0, %v1919
        %v1921 = vrot.slane %v1916, %v1920
        %v1939 = vunpack.c.l.b16 %v1900
        %v1940 = vunpack.c.l.b16 %v1901
        %v1941 = vunpack.c.l.b16 %v1902
        %v1942 = vunpack.c.l.b16 %v1903
        %v1943 = vunpack.c.l.b16 %v1904
        %v1944 = vunpack.c.l.b16 %v1905
        %v1945 = vunpack.c.l.b16 %v1906
        %v1946 = vunpack.c.l.b16 %v1907
        %v1947 = vunpack.c.l.b16 %v1908
        %v1948 = vunpack.c.l.b16 %v1909
        %v1949 = vunpack.c.l.b16 %v1910
        %v1950 = vunpack.c.l.b16 %v1911
        %v1951 = vunpack.c.l.b16 %v1912
        %v1952 = vunpack.c.l.b16 %v1913
        %v1953 = vunpack.c.l.b16 %v1914
        %v1954 = vunpack.c.l.b16 %v1915
        %v1955 = vpack.c.b16 %v1940, %v1939
        %v1956 = vpack.c.b16 %v1942, %v1941
        %v1957 = vpack.c.b16 %v1944, %v1943
        %v1958 = vpack.c.b16 %v1946, %v1945
        %v1959 = vpack.c.b16 %v1948, %v1947
        %v1960 = vpack.c.b16 %v1950, %v1949
        %v1961 = vpack.c.b16 %v1952, %v1951
        %v1962 = vpack.c.b16 %v1954, %v1953
        %1971 = vmatprep.subr.bf16.mxu0 0
        %1972 = vmatpush1.bf16.msra.mxu0 %v1955
        %1973 = vmatprep.subr.bf16.mxu0 0
        %1974 = vmatpush1.bf16.msra.mxu0 %v1956
        %1975 = vmatprep.subr.bf16.mxu0 0
        %1976 = vmatpush1.bf16.msra.mxu0 %v1957
        %1977 = vmatprep.subr.bf16.mxu0 0
        %1978 = vmatpush1.bf16.msra.mxu0 %v1958
        %1979 = vmatprep.subr.bf16.mxu0 0
        %1980 = vmatpush1.bf16.msra.mxu0 %v1959
        %1981 = vmatprep.subr.bf16.mxu0 0
        %1982 = vmatpush1.bf16.msra.mxu0 %v1960
        %1983 = vmatprep.subr.bf16.mxu0 0
        %1984 = vmatpush1.bf16.msra.mxu0 %v1961
        %1985 = vmatprep.subr.bf16.mxu0 0
        %1986 = vmatpush1.bf16.msra.mxu0 %v1962
        %1987 = vmatprep.subr.bf16.mxu0 0
        %1988 = vmatpush1.bf16.msra.mxu0 0
        %1989 = vmatprep.subr.bf16.mxu0 0
        %1990 = vmatpush1.bf16.msra.mxu0 0
        %1991 = vmatprep.subr.bf16.mxu0 0
        %1992 = vmatpush1.bf16.msra.mxu0 0
        %1993 = vmatprep.subr.bf16.mxu0 0
        %1994 = vmatpush1.bf16.msra.mxu0 0
        %1995 = vmatprep.subr.bf16.mxu0 0
        %1996 = vmatpush1.bf16.msra.mxu0 0
        %1997 = vmatprep.subr.bf16.mxu0 0
        %1998 = vmatpush1.bf16.msra.mxu0 0
        %1999 = vmatprep.subr.bf16.mxu0 0
        %2000 = vmatpush1.bf16.msra.mxu0 0
        %2001 = vmatprep.subr.bf16.mxu0 0
        %2002 = vmatpush1.bf16.msra.mxu0 0
        %2003 = vmatprep.mubr.bf16.mxu0 0
        %2004 = vmatmul.mubr.bf16.gmra.mrb[0].mxu0 %v1899
        %v2005 = vpop.f32.mrb[0].mxu0
        %v2006 = vadd.f32 %v1921, %v2005
        %v2007 = vpop.f32.mrb[0].mxu0
        %v2008 = vpop.f32.mrb[0].mxu0
        %v2009 = vpop.f32.mrb[0].mxu0
        %2010 = vdwg.mxu0
        %v2011 = vmax.f32 %v2006, 0.0
        %v2012 = vpack.c.bf16 %v2011, %v2011
        %v2013 = vld [vmem:[#allocation13] sm:$0xf]
        %v2014 = vld [vmem:[#allocation13 + $0x4] sm:$0xf]
        %v2015 = vld [vmem:[#allocation13 + $0x8] sm:$0xf]
        %v2016 = vld [vmem:[#allocation13 + $0xc] sm:$0xf]
        %v2017 = vld [vmem:[#allocation13 + $0x10] sm:$0xf]
        %v2018 = vld [vmem:[#allocation13 + $0x14] sm:$0xf]
        %v2019 = vld [vmem:[#allocation13 + $0x18] sm:$0xf]
        %v2020 = vld [vmem:[#allocation13 + $0x1c] sm:$0xf]
        %v2021 = vld [vmem:[#allocation13 + $0x20] sm:$0xf]
        %v2022 = vld [vmem:[#allocation13 + $0x24] sm:$0xf]
        %v2023 = vld [vmem:[#allocation13 + $0x28] sm:$0xf]
        %v2024 = vld [vmem:[#allocation13 + $0x2c] sm:$0xf]
        %v2025 = vld [vmem:[#allocation13 + $0x30] sm:$0xf]
        %v2026 = vld [vmem:[#allocation13 + $0x34] sm:$0xf]
        %v2027 = vld [vmem:[#allocation13 + $0x38] sm:$0xf]
        %v2028 = vld [vmem:[#allocation13 + $0x3c] sm:$0xf]
        %v2029 = vld [vmem:[%s18] sm:$0x1]
        %v2031 = vlaneseq
        %v2032 = vshrl.u32 %v2031, 7
        %v2033 = vsub.s32 0, %v2032
        %v2034 = vrot.slane %v2029, %v2033
        %v2052 = vunpack.c.l.b16 %v2013
        %v2053 = vunpack.c.l.b16 %v2014
        %v2054 = vunpack.c.l.b16 %v2015
        %v2055 = vunpack.c.l.b16 %v2016
        %v2056 = vunpack.c.l.b16 %v2017
        %v2057 = vunpack.c.l.b16 %v2018
        %v2058 = vunpack.c.l.b16 %v2019
        %v2059 = vunpack.c.l.b16 %v2020
        %v2060 = vunpack.c.l.b16 %v2021
        %v2061 = vunpack.c.l.b16 %v2022
        %v2062 = vunpack.c.l.b16 %v2023
        %v2063 = vunpack.c.l.b16 %v2024
        %v2064 = vunpack.c.l.b16 %v2025
        %v2065 = vunpack.c.l.b16 %v2026
        %v2066 = vunpack.c.l.b16 %v2027
        %v2067 = vunpack.c.l.b16 %v2028
        %v2068 = vpack.c.b16 %v2053, %v2052
        %v2069 = vpack.c.b16 %v2055, %v2054
        %v2070 = vpack.c.b16 %v2057, %v2056
        %v2071 = vpack.c.b16 %v2059, %v2058
        %v2072 = vpack.c.b16 %v2061, %v2060
        %v2073 = vpack.c.b16 %v2063, %v2062
        %v2074 = vpack.c.b16 %v2065, %v2064
        %v2075 = vpack.c.b16 %v2067, %v2066
        %2084 = vmatprep.subr.bf16.mxu0 0
        %2085 = vmatpush1.bf16.msra.mxu0 %v2068
        %2086 = vmatprep.subr.bf16.mxu0 0
        %2087 = vmatpush1.bf16.msra.mxu0 %v2069
        %2088 = vmatprep.subr.bf16.mxu0 0
        %2089 = vmatpush1.bf16.msra.mxu0 %v2070
        %2090 = vmatprep.subr.bf16.mxu0 0
        %2091 = vmatpush1.bf16.msra.mxu0 %v2071
        %2092 = vmatprep.subr.bf16.mxu0 0
        %2093 = vmatpush1.bf16.msra.mxu0 %v2072
        %2094 = vmatprep.subr.bf16.mxu0 0
        %2095 = vmatpush1.bf16.msra.mxu0 %v2073
        %2096 = vmatprep.subr.bf16.mxu0 0
        %2097 = vmatpush1.bf16.msra.mxu0 %v2074
        %2098 = vmatprep.subr.bf16.mxu0 0
        %2099 = vmatpush1.bf16.msra.mxu0 %v2075
        %2100 = vmatprep.subr.bf16.mxu0 0
        %2101 = vmatpush1.bf16.msra.mxu0 0
        %2102 = vmatprep.subr.bf16.mxu0 0
        %2103 = vmatpush1.bf16.msra.mxu0 0
        %2104 = vmatprep.subr.bf16.mxu0 0
        %2105 = vmatpush1.bf16.msra.mxu0 0
        %2106 = vmatprep.subr.bf16.mxu0 0
        %2107 = vmatpush1.bf16.msra.mxu0 0
        %2108 = vmatprep.subr.bf16.mxu0 0
        %2109 = vmatpush1.bf16.msra.mxu0 0
        %2110 = vmatprep.subr.bf16.mxu0 0
        %2111 = vmatpush1.bf16.msra.mxu0 0
        %2112 = vmatprep.subr.bf16.mxu0 0
        %2113 = vmatpush1.bf16.msra.mxu0 0
        %2114 = vmatprep.subr.bf16.mxu0 0
        %2115 = vmatpush1.bf16.msra.mxu0 0
        %2116 = vmatprep.mubr.bf16.mxu0 0
        %2117 = vmatmul.mubr.bf16.gmra.mrb[0].mxu0 %v2012
        %v2118 = vpop.f32.mrb[0].mxu0
        %v2119 = vadd.f32 %v2034, %v2118
        %v2120 = vpop.f32.mrb[0].mxu0
        %v2121 = vpop.f32.mrb[0].mxu0
        %v2122 = vpop.f32.mrb[0].mxu0
        %2123 = vdwg.mxu0
        %v2124 = vtanh.pop %v2119
        %2125 = vst [vmem:[%s714] sm:$0xff] %v2124
        %p2126 = scmp.lt.s32.totalorder %s35, 1
        %s2127 = scalar_select %p2126, %s35, 1
        %s2128 = smul.addr %s2127, 8
        %s2129 = scalar_lea.vmem %s19, %s2128
        // Predicated region
        $region129: #{alpha_slow_forward.1} parent=95 // pred_check
          %p2130 = pneg %p457
        $region130: #{alpha_slow_forward.1} parent=95 // pred_check_branch
          %2132 = sbr.rel (%p2130) target = $region132
        $region131: #{alpha_slow_forward.1} parent=95 // pred_region
          _
        $region132: #{alpha_slow_forward.1} parent=95 // pred_fallthru
          _
      $region96: #{alpha_slow_forward.1} parent=5 // pred_fallthru
        _
      %p2133 = scmp.le.s32.totalorder 2, %s30
      // Predicated region
      $region133: #{alpha_slow_forward.1} parent=5 // pred_check
        %p2134 = pneg %p2133
      $region134: #{alpha_slow_forward.1} parent=5 // pred_check_branch
        %2136 = sbr.rel (%p2134) target = $region136
      $region135: #{alpha_slow_forward.1} parent=5 // pred_region
        %s2137 = ssub.s32 %s30, 2
        // Predicated region
        $region137: #{alpha_slow_forward.1} parent=135 // pred_check
          %p2138 = pneg %p463
        $region138: #{alpha_slow_forward.1} parent=135 // pred_check_branch
          %2140 = sbr.rel (%p2138) target = $region140
        $region139: #{alpha_slow_forward.1} parent=135 // pred_region
          %p2141 = scmp.lt.s32.totalorder %s36, 1
          %s2142 = scalar_select %p2141, %s36, 1
          %s2143 = smul.addr %s2142, 8
          %s2144 = scalar_lea.vmem %s19, %s2143
        $region140: #{alpha_slow_forward.1} parent=135 // pred_fallthru
          _
      $region136: #{alpha_slow_forward.1} parent=5 // pred_fallthru
        _
    $region6: #{alpha_slow_forward.1} parent=1 // loop_footer
      %s34 = sadd.s32 1, %s30
    $region7: #{alpha_slow_forward.1} parent=1 // loop_footer_branch
      %29 = sbr.rel target = $region3
    $region8: #{alpha_slow_forward.1} parent=1 // loop_exit
      _
    %2145 = vsyncpa [#allocation3], 1
    %s2146 = scalar_lea.sflag [#allocation3], 1
    %2147 = vsyncpa %s2146, 1
    %2148 = vsyncpa [#allocation5], 1
    %2149 = vsyncpa [#allocation8], 1
    %2150 = vsyncpa [#allocation11], 1
    %2151 = vsyncpa [#allocation14], 1

</llo_original>
